<compile_context>
chip_gen: v7x
topology: tpu7x:2x2x1
jax: 0.10.0
libtpu: 0.0.40
codegen_flags: <defaults>
</compile_context>

<pallas_src>
import functools

import jax
import jax.numpy as jnp
from jax import lax
from jax.experimental import pallas as pl
from jax.experimental.pallas import tpu as pltpu


# ---------------------------------------------------------------------------
# Kernel
# ---------------------------------------------------------------------------
def _bottleneck_kernel(x_ref, s1_ref, h1_ref, w1_ref, c1b_ref, w2_ref, c2b_ref,
                       w3_ref, b3_ref, o_ref, *, identity_skip, mm_dtype):
    nb, H, W, Cin = x_ref.shape
    Cmid = w1_ref.shape[1]
    Cout = w3_ref.shape[1]
    M = nb * H * W

    x = x_ref[...].astype(jnp.float32)            # (nb, H, W, Cin)
    xf = x.reshape(M, Cin)

    # ---- relu(bn1(x)) ----
    t = jnp.maximum(xf * s1_ref[...] + h1_ref[...], 0.0)

    # ---- conv1 (1x1); bn2 scale folded into w1, bias = b1*s2 + h2; relu ----
    a = jnp.dot(t.astype(mm_dtype), w1_ref[...],
                preferred_element_type=jnp.float32) + c1b_ref[...]
    # Cast once; every conv2 intermediate (taps / W-slab) lives in mm_dtype.
    a = jnp.maximum(a, 0.0).astype(mm_dtype)

    # ---- conv2 (3x3, pad=1) ----
    # W-neighbours via zero-padded static slices (no roll, no mask, no padded
    # scratch).  One (M, 3*Cmid) W-tap slab feeds three K=3*Cmid matmuls (one
    # per kernel row kh); the three products are H-shifted with outer-dim
    # slices (cheap address math) and accumulated in f32.
    a4 = a.reshape(nb, H, W, Cmid)
    zcol = jnp.zeros((nb, H, 1, Cmid), mm_dtype)
    a_l = jnp.concatenate([zcol, a4[:, :, :W - 1, :]], axis=2)    # tap at w-1
    a_r = jnp.concatenate([a4[:, :, 1:, :], zcol], axis=2)        # tap at w+1
    # Channel order [w-1, w, w+1] matches w2.reshape(9*Cmid, Cmid) (kh, kw, cin).
    wslab = jnp.concatenate([a_l, a4, a_r], axis=-1).reshape(M, 3 * Cmid)

    def kh_matmul(kh):
        wk = w2_ref[kh * 3 * Cmid:(kh + 1) * 3 * Cmid, :]         # static slice
        p = jnp.dot(wslab, wk, preferred_element_type=jnp.float32)
        return p.reshape(nb, H, W, Cmid)

    zrow = jnp.zeros((nb, 1, W, Cmid), jnp.float32)
    p0 = kh_matmul(0)                                             # needs row h-1
    b4 = jnp.concatenate([zrow, p0[:, :H - 1]], axis=1)
    b4 = b4 + kh_matmul(1)                                        # needs row h
    p2 = kh_matmul(2)                                             # needs row h+1
    b4 = b4 + jnp.concatenate([p2[:, 1:], zrow], axis=1)

    # relu(bn2(conv2(.))): scale folded into w2, bias = b2*s2 + h2.
    b = jnp.maximum(b4.reshape(M, Cmid) + c2b_ref[...], 0.0)

    # ---- conv3 (+ conv_skip fused along K); biases pre-combined ----
    if identity_skip:
        c = jnp.dot(b.astype(mm_dtype), w3_ref[...],
                    preferred_element_type=jnp.float32) + b3_ref[...] + xf
    else:
        bk = jnp.concatenate([b.astype(mm_dtype), xf.astype(mm_dtype)], axis=-1)
        c = jnp.dot(bk, w3_ref[...],
                    preferred_element_type=jnp.float32) + b3_ref[...]

    o_ref[...] = jnp.maximum(c, 0.0).reshape(nb, H, W, Cout).astype(o_ref.dtype)


# ---------------------------------------------------------------------------
# Wrapper-side parameter folding / tiling heuristics
# ---------------------------------------------------------------------------
def _fold_params(params, matmul_dtype):
    """Fold conv biases + bn2 affine into the conv weights, fuse conv3/conv_skip."""
    s2 = params["bn2_scale"]                      # (1, Cmid)
    h2 = params["bn2_shift"]
    Cmid = s2.shape[1]

    w1 = (params["w1"] * s2).astype(matmul_dtype)                  # (Cin, Cmid)
    c1b = params["b1"] * s2 + h2                                   # (1, Cmid)

    w2 = (params["w2"] * s2[0][None, None, None, :]).reshape(9 * Cmid, Cmid)
    w2 = w2.astype(matmul_dtype)                                   # (9*Cmid, Cmid)
    c2b = params["b2"] * s2 + h2                                   # (1, Cmid)

    if params.get("ws") is not None:
        w3s = jnp.concatenate([params["w3"], params["ws"]], axis=0)  # (Cmid+Cin, Cout)
        b3s = params["b3"] + params["bs"]
        identity_skip = False
    else:
        w3s = params["w3"]                                           # (Cmid, Cout)
        b3s = params["b3"]
        identity_skip = True
    w3s = w3s.astype(matmul_dtype)

    arrays = dict(s1=params["bn1_scale"], h1=params["bn1_shift"],
                  w1=w1, c1b=c1b, w2=w2, c2b=c2b, w3s=w3s, b3s=b3s)
    return arrays, identity_skip


def _vmem_limit_bytes():
    """Chip-aware scoped-VMEM limit: ~100 MiB on v5e/v6e (128 MiB physical),
    ~48 MiB on v7x (64 MiB physical), 48 MiB when the chip can't be queried."""
    try:
        cap = int(pltpu.get_tpu_info().vmem_capacity_bytes)
    except Exception:
        cap = 64 * 1024 * 1024
    return min(max(cap - 16 * 1024 * 1024, 32 * 1024 * 1024), 100 * 1024 * 1024)


def _pick_images_per_step(N, H, W, Cin, Cmid, Cout, budget_bytes):
    """Largest divisor of N whose activation footprint fits the VMEM budget,
    while keeping enough grid steps for DMA/compute overlap (>=4 when N allows,
    so both v7x TensorCores get >=2 steps each)."""
    # Rough per-pixel footprint (bytes), accounting for the conv2 intermediates:
    #   x + t (f32, incl. double-buffered input tile)        ~ 12*Cin
    #   double-buffered output tile (f32 worst case)         ~  8*Cout
    #   bf16 taps + W-slab (a4, a_l, a_r, concat)            ~ 12*Cmid
    #   f32 accumulators (b4, one kh product, b)             ~ 12*Cmid
    #   conv3 K-concat (bf16)                                ~  2*(Cmid+Cin)
    per_px = 14 * Cin + 8 * Cout + 26 * Cmid
    per_img = H * W * per_px
    cap = max(1, budget_bytes // max(per_img, 1))

    if N >= 4:
        min_steps = 4          # megacore-aware: 2 TCs x >=2 steps each
    elif N >= 2:
        min_steps = 2
    else:
        min_steps = 1
    cap = min(cap, max(1, N // min_steps))

    best = 1
    for d in range(1, N + 1):
        if N % d == 0 and d <= cap:
            best = d
    return best


# ---------------------------------------------------------------------------
# Public entry points
# ---------------------------------------------------------------------------
def residual_bottleneck_block_nhwc(x, params, *, matmul_dtype=jnp.bfloat16,
                                   images_per_step=None, out_dtype=None):
    """Fused block on NHWC input (N, H, W, Cin) -> (N, H, W, Cout).

    Pass out_dtype=jnp.bfloat16 (and feed bf16 inputs) when the surrounding
    model tolerates bf16 activations -- the block is HBM-bandwidth bound at
    realistic widths, so halving I/O bytes is the largest wall-clock lever.
    """
    N, H, W, Cin = x.shape
    arrays, identity_skip = _fold_params(params, matmul_dtype)
    Cmid = arrays["w1"].shape[1]
    Cout = arrays["w3s"].shape[1]
    out_dtype = out_dtype or x.dtype

    vmem_limit = _vmem_limit_bytes()
    nb = images_per_step or _pick_images_per_step(
        N, H, W, Cin, Cmid, Cout, budget_bytes=vmem_limit // 2)
    assert N % nb == 0, (N, nb)
    grid = (N // nb,)

    kernel = functools.partial(_bottleneck_kernel,
                               identity_skip=identity_skip,
                               mm_dtype=matmul_dtype)

    def _const_index_map(ndim):
        return lambda n: (0,) * ndim

    def wspec(shape):
        return pl.BlockSpec(shape, _const_index_map(len(shape)))

    k_last = Cmid + (0 if identity_skip else Cin)
    flops = 2 * N * H * W * (Cin * Cmid + 9 * Cmid * Cmid + k_last * Cout)
    bytes_accessed = (
        int(x.size) * x.dtype.itemsize
        + N * H * W * Cout * jnp.dtype(out_dtype).itemsize
        + sum(int(a.size) * a.dtype.itemsize for a in arrays.values()))

    out = pl.pallas_call(
        kernel,
        out_shape=jax.ShapeDtypeStruct((N, H, W, Cout), out_dtype),
        grid=grid,
        in_specs=[
            pl.BlockSpec((nb, H, W, Cin), lambda n: (n, 0, 0, 0)),   # x
            wspec((1, Cin)), wspec((1, Cin)),                        # bn1 affine
            wspec((Cin, Cmid)), wspec((1, Cmid)),                    # conv1 (folded)
            wspec((9 * Cmid, Cmid)), wspec((1, Cmid)),               # conv2 (folded)
            wspec(arrays["w3s"].shape), wspec((1, Cout)),            # conv3(+skip)
        ],
        out_specs=pl.BlockSpec((nb, H, W, Cout), lambda n: (n, 0, 0, 0)),
        compiler_params=pltpu.CompilerParams(
            dimension_semantics=("parallel",),
            vmem_limit_bytes=vmem_limit),
        cost_estimate=pl.CostEstimate(flops=flops, transcendentals=0,
                                      bytes_accessed=bytes_accessed),
    )(x, arrays["s1"], arrays["h1"], arrays["w1"], arrays["c1b"],
      arrays["w2"], arrays["c2b"], arrays["w3s"], arrays["b3s"])
    return out


def residual_bottleneck_block(x_nchw, params, **kwargs):
    """PyTorch-layout (NCHW) convenience wrapper.

    The two boundary transposes are full HBM passes on a memory-bound block;
    models that already run NHWC should call residual_bottleneck_block_nhwc
    directly and skip them.
    """
    x = jnp.transpose(x_nchw, (0, 2, 3, 1))            # NCHW -> NHWC
    y = residual_bottleneck_block_nhwc(x, params, **kwargs)
    return jnp.transpose(y, (0, 3, 1, 2))              # NHWC -> NCHW


# ---------------------------------------------------------------------------
# Synthetic parameters + pure-JAX reference
# ---------------------------------------------------------------------------
def make_params(key, in_channels, out_channels):
    """Deterministic synthetic parameters matching the PyTorch module shapes."""
    cmid = out_channels // 2
    eps = 1e-5
    ks = jax.random.split(key, 16)

    def bn(kg, kb, km, kv, c):
        gamma = 1.0 + 0.1 * jax.random.normal(kg, (c,), jnp.float32)
        beta = 0.1 * jax.random.normal(kb, (c,), jnp.float32)
        mean = 0.1 * jax.random.normal(km, (c,), jnp.float32)
        var = jax.random.uniform(kv, (c,), jnp.float32, 0.5, 1.5)
        scale = gamma * lax.rsqrt(var + eps)
        shift = beta - mean * scale
        return scale.reshape(1, c), shift.reshape(1, c)

    bn1_scale, bn1_shift = bn(ks[0], ks[1], ks[2], ks[3], in_channels)
    bn2_scale, bn2_shift = bn(ks[4], ks[5], ks[6], ks[7], cmid)

    # Conv weights in (Cin, Cout) / HWIO layout (transposed from PyTorch OIHW).
    w1 = 0.2 * jax.random.normal(ks[8], (in_channels, cmid), jnp.float32)
    b1 = 0.1 * jax.random.normal(ks[9], (1, cmid), jnp.float32)
    w2 = 0.2 * jax.random.normal(ks[10], (3, 3, cmid, cmid), jnp.float32)
    b2 = 0.1 * jax.random.normal(ks[11], (1, cmid), jnp.float32)
    w3 = 0.2 * jax.random.normal(ks[12], (cmid, out_channels), jnp.float32)
    b3 = 0.1 * jax.random.normal(ks[13], (1, out_channels), jnp.float32)
    if in_channels != out_channels:
        ws = 0.2 * jax.random.normal(ks[14], (in_channels, out_channels), jnp.float32)
        bs = 0.1 * jax.random.normal(ks[15], (1, out_channels), jnp.float32)
    else:
        ws = None   # skip path is the identity: out += x (no conv_skip matmul)
        bs = None

    return dict(bn1_scale=bn1_scale, bn1_shift=bn1_shift,
                bn2_scale=bn2_scale, bn2_shift=bn2_shift,
                w1=w1, b1=b1, w2=w2, b2=b2, w3=w3, b3=b3, ws=ws, bs=bs)


def reference_forward(x_nchw, params):
    """Pure-JAX reference (NHWC internally), mirrors the PyTorch forward."""
    x = jnp.transpose(x_nchw, (0, 2, 3, 1))
    relu = lambda v: jnp.maximum(v, 0.0)
    hp = lax.Precision.HIGHEST

    t = relu(x * params["bn1_scale"][0] + params["bn1_shift"][0])
    a = jnp.einsum("nhwc,cd->nhwd", t, params["w1"], precision=hp) + params["b1"][0]
    a = relu(a * params["bn2_scale"][0] + params["bn2_shift"][0])
    bconv = lax.conv_general_dilated(
        a, params["w2"], window_strides=(1, 1), padding="SAME",
        dimension_numbers=("NHWC", "HWIO", "NHWC"), precision=hp) + params["b2"][0]
    b = relu(bconv * params["bn2_scale"][0] + params["bn2_shift"][0])
    c = jnp.einsum("nhwc,cd->nhwd", b, params["w3"], precision=hp) + params["b3"][0]
    if params.get("ws") is not None:
        skip = jnp.einsum("nhwc,cd->nhwd", x, params["ws"], precision=hp) + params["bs"][0]
    else:
        skip = x
    out = relu(c + skip)
    return jnp.transpose(out, (0, 3, 1, 2))


# ---------------------------------------------------------------------------
# Self-test
# ---------------------------------------------------------------------------
if __name__ == "__main__":
    key = jax.random.PRNGKey(0)
    kx, kp, kx2, kp2 = jax.random.split(key, 4)

    # Case 1: in_channels != out_channels (conv_skip path), PyTorch NCHW input.
    N, Cin, Cout, H, W = 2, 4, 8, 16, 16
    x = jax.random.normal(kx, (N, Cin, H, W), jnp.float32)
    params = make_params(kp, Cin, Cout)
    ref = jax.block_until_ready(reference_forward(x, params))

    # Tight correctness check with f32 MXU operands.
    out_f32 = jax.block_until_ready(
        residual_bottleneck_block(x, params, matmul_dtype=jnp.float32))
    assert out_f32.shape == (N, Cout, H, W), out_f32.shape
    assert bool(jnp.all(jnp.isfinite(out_f32)))
    assert jnp.allclose(out_f32, ref, rtol=1e-2, atol=1e-2), \
        float(jnp.max(jnp.abs(out_f32 - ref)))

    # Default fast path: bf16 MXU operands / intermediates, f32 output.
    out_bf = jax.block_until_ready(residual_bottleneck_block(x, params))
    assert out_bf.shape == (N, Cout, H, W), out_bf.shape
    assert bool(jnp.all(jnp.isfinite(out_bf)))
    assert jnp.allclose(out_bf, ref, rtol=6e-2, atol=8e-2), \
        float(jnp.max(jnp.abs(out_bf - ref)))

    # bf16 activation output (the HBM-bandwidth lever from the review).
    out_bfio = jax.block_until_ready(
        residual_bottleneck_block(x, params, out_dtype=jnp.bfloat16))
    assert out_bfio.dtype == jnp.bfloat16
    assert jnp.allclose(out_bfio.astype(jnp.float32), ref, rtol=8e-2, atol=1e-1), \
        float(jnp.max(jnp.abs(out_bfio.astype(jnp.float32) - ref)))

    # Case 2: in_channels == out_channels (identity skip, no conv_skip matmul).
    N2, C2, H2, W2 = 2, 8, 8, 8
    x2 = jax.random.normal(kx2, (N2, C2, H2, W2), jnp.float32)
    params2 = make_params(kp2, C2, C2)
    ref2 = jax.block_until_ready(reference_forward(x2, params2))
    out2 = jax.block_until_ready(
        residual_bottleneck_block(x2, params2, matmul_dtype=jnp.float32))
    assert out2.shape == (N2, C2, H2, W2), out2.shape
    assert jnp.allclose(out2, ref2, rtol=1e-2, atol=1e-2), \
        float(jnp.max(jnp.abs(out2 - ref2)))

    print("KERNEL_OK")
</pallas_src>

<mosaic_0001>
module attributes {stable_mosaic.version = 11 : i64} {
  func.func @_bottleneck_kernel(%arg0: i32, %arg1: memref<1x16x16x4xf32, #tpu.memory_space<vmem>>, %arg2: memref<1x4xf32, #tpu.memory_space<vmem>>, %arg3: memref<1x4xf32, #tpu.memory_space<vmem>>, %arg4: memref<4x4xf32, #tpu.memory_space<vmem>>, %arg5: memref<1x4xf32, #tpu.memory_space<vmem>>, %arg6: memref<36x4xf32, #tpu.memory_space<vmem>>, %arg7: memref<1x4xf32, #tpu.memory_space<vmem>>, %arg8: memref<8x8xf32, #tpu.memory_space<vmem>>, %arg9: memref<1x8xf32, #tpu.memory_space<vmem>>, %arg10: memref<1x16x16x8xf32, #tpu.memory_space<vmem>>) attributes {dimension_semantics = [#tpu.dimension_semantics<parallel>], iteration_bounds = array<i64: 2>, scalar_prefetch = 0 : i64, scratch_operands = 0 : i64, tpu.core_type = #tpu.core_type<tc>, window_params = [{transform_indices = @transform_0, window_bounds = array<i64: 1, 16, 16, 4>}, {pipeline_mode = #tpu.pipeline_mode<synchronous>, transform_indices = @transform_1, window_bounds = array<i64: 1, 4>}, {pipeline_mode = #tpu.pipeline_mode<synchronous>, transform_indices = @transform_2, window_bounds = array<i64: 1, 4>}, {pipeline_mode = #tpu.pipeline_mode<synchronous>, transform_indices = @transform_3, window_bounds = array<i64: 4, 4>}, {pipeline_mode = #tpu.pipeline_mode<synchronous>, transform_indices = @transform_4, window_bounds = array<i64: 1, 4>}, {pipeline_mode = #tpu.pipeline_mode<synchronous>, transform_indices = @transform_5, window_bounds = array<i64: 36, 4>}, {pipeline_mode = #tpu.pipeline_mode<synchronous>, transform_indices = @transform_6, window_bounds = array<i64: 1, 4>}, {pipeline_mode = #tpu.pipeline_mode<synchronous>, transform_indices = @transform_7, window_bounds = array<i64: 8, 8>}, {pipeline_mode = #tpu.pipeline_mode<synchronous>, transform_indices = @transform_8, window_bounds = array<i64: 1, 8>}, {transform_indices = @transform_9, window_bounds = array<i64: 1, 16, 16, 8>}]} {
    %c0 = arith.constant 0 : index
    %c0_0 = arith.constant 0 : index
    %c0_1 = arith.constant 0 : index
    %c0_2 = arith.constant 0 : index
    %0 = vector.load %arg1[%c0, %c0_0, %c0_1, %c0_2] : memref<1x16x16x4xf32, #tpu.memory_space<vmem>>, vector<1x16x16x4xf32>
    %1 = vector.shape_cast %0 : vector<1x16x16x4xf32> to vector<256x4xf32>
    %c0_3 = arith.constant 0 : index
    %c0_4 = arith.constant 0 : index
    %2 = vector.load %arg2[%c0_3, %c0_4] : memref<1x4xf32, #tpu.memory_space<vmem>>, vector<1x4xf32>
    %3 = vector.broadcast %2 : vector<1x4xf32> to vector<256x4xf32>
    %4 = arith.mulf %1, %3 : vector<256x4xf32>
    %c0_5 = arith.constant 0 : index
    %c0_6 = arith.constant 0 : index
    %5 = vector.load %arg3[%c0_5, %c0_6] : memref<1x4xf32, #tpu.memory_space<vmem>>, vector<1x4xf32>
    %6 = vector.broadcast %5 : vector<1x4xf32> to vector<256x4xf32>
    %7 = arith.addf %4, %6 : vector<256x4xf32>
    %cst = arith.constant 0.000000e+00 : f32
    %8 = vector.broadcast %cst : f32 to vector<256x4xf32>
    %9 = arith.maximumf %7, %8 : vector<256x4xf32>
    %c0_7 = arith.constant 0 : index
    %c0_8 = arith.constant 0 : index
    %10 = vector.load %arg4[%c0_7, %c0_8] : memref<4x4xf32, #tpu.memory_space<vmem>>, vector<4x4xf32>
    %cst_9 = arith.constant dense<0.000000e+00> : vector<256x4xf32>
    %11 = tpu.matmul %9, %10, %cst_9 {dimension_numbers = #tpu.dot_dimension_numbers<[1], [0], [0], [1], [0, 0, 1, 1], [], []>} : vector<256x4xf32>, vector<4x4xf32>, vector<256x4xf32> -> vector<256x4xf32>
    %c0_10 = arith.constant 0 : index
    %c0_11 = arith.constant 0 : index
    %12 = vector.load %arg5[%c0_10, %c0_11] : memref<1x4xf32, #tpu.memory_space<vmem>>, vector<1x4xf32>
    %13 = vector.broadcast %12 : vector<1x4xf32> to vector<256x4xf32>
    %14 = arith.addf %11, %13 : vector<256x4xf32>
    %cst_12 = arith.constant 0.000000e+00 : f32
    %15 = vector.broadcast %cst_12 : f32 to vector<256x4xf32>
    %16 = arith.maximumf %14, %15 : vector<256x4xf32>
    %17 = vector.shape_cast %16 : vector<256x4xf32> to vector<1x16x16x4xf32>
    %cst_13 = arith.constant 0.000000e+00 : f32
    %18 = vector.broadcast %cst_13 : f32 to vector<1x16x1x4xf32>
    %19 = vector.extract_strided_slice %17 {offsets = [0, 0, 0, 0], sizes = [1, 16, 15, 4], strides = [1, 1, 1, 1]} : vector<1x16x16x4xf32> to vector<1x16x15x4xf32>
    %20 = tpu.concatenate %18, %19 in 2 : vector<1x16x1x4xf32>, vector<1x16x15x4xf32> -> vector<1x16x16x4xf32>
    %21 = vector.extract_strided_slice %17 {offsets = [0, 0, 1, 0], sizes = [1, 16, 15, 4], strides = [1, 1, 1, 1]} : vector<1x16x16x4xf32> to vector<1x16x15x4xf32>
    %22 = tpu.concatenate %21, %18 in 2 : vector<1x16x15x4xf32>, vector<1x16x1x4xf32> -> vector<1x16x16x4xf32>
    %23 = tpu.concatenate %20, %17, %22 in 3 : vector<1x16x16x4xf32>, vector<1x16x16x4xf32>, vector<1x16x16x4xf32> -> vector<1x16x16x12xf32>
    %24 = vector.shape_cast %23 : vector<1x16x16x12xf32> to vector<256x12xf32>
    %cst_14 = arith.constant 0.000000e+00 : f32
    %25 = vector.broadcast %cst_14 : f32 to vector<1x1x16x4xf32>
    %c0_15 = arith.constant 0 : index
    %c0_16 = arith.constant 0 : index
    %26 = vector.load %arg6[%c0_15, %c0_16] : memref<36x4xf32, #tpu.memory_space<vmem>>, vector<12x4xf32>
    %cst_17 = arith.constant dense<0.000000e+00> : vector<256x4xf32>
    %27 = tpu.matmul %24, %26, %cst_17 {dimension_numbers = #tpu.dot_dimension_numbers<[1], [0], [0], [1], [0, 0, 1, 1], [], []>} : vector<256x12xf32>, vector<12x4xf32>, vector<256x4xf32> -> vector<256x4xf32>
    %28 = vector.shape_cast %27 : vector<256x4xf32> to vector<1x16x16x4xf32>
    %29 = vector.extract_strided_slice %28 {offsets = [0, 0, 0, 0], sizes = [1, 15, 16, 4], strides = [1, 1, 1, 1]} : vector<1x16x16x4xf32> to vector<1x15x16x4xf32>
    %30 = tpu.concatenate %25, %29 in 1 : vector<1x1x16x4xf32>, vector<1x15x16x4xf32> -> vector<1x16x16x4xf32>
    %c12 = arith.constant 12 : index
    %c0_18 = arith.constant 0 : index
    %31 = vector.load %arg6[%c12, %c0_18] : memref<36x4xf32, #tpu.memory_space<vmem>>, vector<12x4xf32>
    %cst_19 = arith.constant dense<0.000000e+00> : vector<256x4xf32>
    %32 = tpu.matmul %24, %31, %cst_19 {dimension_numbers = #tpu.dot_dimension_numbers<[1], [0], [0], [1], [0, 0, 1, 1], [], []>} : vector<256x12xf32>, vector<12x4xf32>, vector<256x4xf32> -> vector<256x4xf32>
    %33 = vector.shape_cast %32 : vector<256x4xf32> to vector<1x16x16x4xf32>
    %34 = arith.addf %30, %33 : vector<1x16x16x4xf32>
    %c24 = arith.constant 24 : index
    %c0_20 = arith.constant 0 : index
    %35 = vector.load %arg6[%c24, %c0_20] : memref<36x4xf32, #tpu.memory_space<vmem>>, vector<12x4xf32>
    %cst_21 = arith.constant dense<0.000000e+00> : vector<256x4xf32>
    %36 = tpu.matmul %24, %35, %cst_21 {dimension_numbers = #tpu.dot_dimension_numbers<[1], [0], [0], [1], [0, 0, 1, 1], [], []>} : vector<256x12xf32>, vector<12x4xf32>, vector<256x4xf32> -> vector<256x4xf32>
    %37 = vector.shape_cast %36 : vector<256x4xf32> to vector<1x16x16x4xf32>
    %38 = vector.extract_strided_slice %37 {offsets = [0, 1, 0, 0], sizes = [1, 15, 16, 4], strides = [1, 1, 1, 1]} : vector<1x16x16x4xf32> to vector<1x15x16x4xf32>
    %39 = tpu.concatenate %38, %25 in 1 : vector<1x15x16x4xf32>, vector<1x1x16x4xf32> -> vector<1x16x16x4xf32>
    %40 = arith.addf %34, %39 : vector<1x16x16x4xf32>
    %41 = vector.shape_cast %40 : vector<1x16x16x4xf32> to vector<256x4xf32>
    %c0_22 = arith.constant 0 : index
    %c0_23 = arith.constant 0 : index
    %42 = vector.load %arg7[%c0_22, %c0_23] : memref<1x4xf32, #tpu.memory_space<vmem>>, vector<1x4xf32>
    %43 = vector.broadcast %42 : vector<1x4xf32> to vector<256x4xf32>
    %44 = arith.addf %41, %43 : vector<256x4xf32>
    %cst_24 = arith.constant 0.000000e+00 : f32
    %45 = vector.broadcast %cst_24 : f32 to vector<256x4xf32>
    %46 = arith.maximumf %44, %45 : vector<256x4xf32>
    %47 = tpu.concatenate %46, %1 in 1 : vector<256x4xf32>, vector<256x4xf32> -> vector<256x8xf32>
    %c0_25 = arith.constant 0 : index
    %c0_26 = arith.constant 0 : index
    %48 = vector.load %arg8[%c0_25, %c0_26] : memref<8x8xf32, #tpu.memory_space<vmem>>, vector<8x8xf32>
    %cst_27 = arith.constant dense<0.000000e+00> : vector<256x8xf32>
    %49 = tpu.matmul %47, %48, %cst_27 {dimension_numbers = #tpu.dot_dimension_numbers<[1], [0], [0], [1], [0, 0, 1, 1], [], []>} : vector<256x8xf32>, vector<8x8xf32>, vector<256x8xf32> -> vector<256x8xf32>
    %c0_28 = arith.constant 0 : index
    %c0_29 = arith.constant 0 : index
    %50 = vector.load %arg9[%c0_28, %c0_29] : memref<1x8xf32, #tpu.memory_space<vmem>>, vector<1x8xf32>
    %51 = vector.broadcast %50 : vector<1x8xf32> to vector<256x8xf32>
    %52 = arith.addf %49, %51 : vector<256x8xf32>
    %cst_30 = arith.constant 0.000000e+00 : f32
    %53 = vector.broadcast %cst_30 : f32 to vector<256x8xf32>
    %54 = arith.maximumf %52, %53 : vector<256x8xf32>
    %55 = vector.shape_cast %54 : vector<256x8xf32> to vector<1x16x16x8xf32>
    %c0_31 = arith.constant 0 : index
    %c0_32 = arith.constant 0 : index
    %c0_33 = arith.constant 0 : index
    %c0_34 = arith.constant 0 : index
    %56 = vector.load %arg10[%c0_31, %c0_32, %c0_33, %c0_34] : memref<1x16x16x8xf32, #tpu.memory_space<vmem>>, vector<1x16x16x8xf32>
    tpu.vector_store %arg10[%c0_31, %c0_32, %c0_33, %c0_34], %55 {strides = array<i32>} : memref<1x16x16x8xf32, #tpu.memory_space<vmem>>, vector<1x16x16x8xf32>,
    return
  }
  func.func @transform_0(%arg0: i32) -> (i32, i32, i32, i32) {
    %c0_i32 = arith.constant 0 : i32
    %c0_i32_0 = arith.constant 0 : i32
    %c0_i32_1 = arith.constant 0 : i32
    %c0_i32_2 = arith.constant 0 : i32
    return %arg0, %c0_i32, %c0_i32_0, %c0_i32_1 : i32, i32, i32, i32
  }
  func.func @transform_1(%arg0: i32) -> (i32, i32) {
    %c0_i32 = arith.constant 0 : i32
    %c0_i32_0 = arith.constant 0 : i32
    %c0_i32_1 = arith.constant 0 : i32
    return %c0_i32, %c0_i32_0 : i32, i32
  }
  func.func @transform_2(%arg0: i32) -> (i32, i32) {
    %c0_i32 = arith.constant 0 : i32
    %c0_i32_0 = arith.constant 0 : i32
    %c0_i32_1 = arith.constant 0 : i32
    return %c0_i32, %c0_i32_0 : i32, i32
  }
  func.func @transform_3(%arg0: i32) -> (i32, i32) {
    %c0_i32 = arith.constant 0 : i32
    %c0_i32_0 = arith.constant 0 : i32
    %c0_i32_1 = arith.constant 0 : i32
    return %c0_i32, %c0_i32_0 : i32, i32
  }
  func.func @transform_4(%arg0: i32) -> (i32, i32) {
    %c0_i32 = arith.constant 0 : i32
    %c0_i32_0 = arith.constant 0 : i32
    %c0_i32_1 = arith.constant 0 : i32
    return %c0_i32, %c0_i32_0 : i32, i32
  }
  func.func @transform_5(%arg0: i32) -> (i32, i32) {
    %c0_i32 = arith.constant 0 : i32
    %c0_i32_0 = arith.constant 0 : i32
    %c0_i32_1 = arith.constant 0 : i32
    return %c0_i32, %c0_i32_0 : i32, i32
  }
  func.func @transform_6(%arg0: i32) -> (i32, i32) {
    %c0_i32 = arith.constant 0 : i32
    %c0_i32_0 = arith.constant 0 : i32
    %c0_i32_1 = arith.constant 0 : i32
    return %c0_i32, %c0_i32_0 : i32, i32
  }
  func.func @transform_7(%arg0: i32) -> (i32, i32) {
    %c0_i32 = arith.constant 0 : i32
    %c0_i32_0 = arith.constant 0 : i32
    %c0_i32_1 = arith.constant 0 : i32
    return %c0_i32, %c0_i32_0 : i32, i32
  }
  func.func @transform_8(%arg0: i32) -> (i32, i32) {
    %c0_i32 = arith.constant 0 : i32
    %c0_i32_0 = arith.constant 0 : i32
    %c0_i32_1 = arith.constant 0 : i32
    return %c0_i32, %c0_i32_0 : i32, i32
  }
  func.func @transform_9(%arg0: i32) -> (i32, i32, i32, i32) {
    %c0_i32 = arith.constant 0 : i32
    %c0_i32_0 = arith.constant 0 : i32
    %c0_i32_1 = arith.constant 0 : i32
    %c0_i32_2 = arith.constant 0 : i32
    return %arg0, %c0_i32, %c0_i32_0, %c0_i32_1 : i32, i32, i32, i32
  }
}

</mosaic_0001>

<llo_original>
// kernel: tpu_custom_call.1
$region0: #{tpu_custom_call.1}
  #allocation0 [shape = 'u32[]', space=smem, size = 0x4, offset = 0x4, fixed_abs, tag = 'smem constant byte address 0x4 - core index']
  #allocation1 [shape = 'u32[144,128]{1,0:T(1,128)}', space=vmem, size = 0x12000, scoped, tag = 'internal scratch']
  %s0 = inlined_call_operand.vmem [shape: f32[2,16,16,4], index: 0, kind: input, shape index: {}]
  %s1 = inlined_call_operand.vmem [shape: f32[1,4], index: 1, kind: input, shape index: {}]
  %s2 = inlined_call_operand.vmem [shape: f32[1,4], index: 2, kind: input, shape index: {}]
  %s3 = inlined_call_operand.vmem [shape: f32[4,4], index: 3, kind: input, shape index: {}]
  %s4 = inlined_call_operand.vmem [shape: f32[1,4], index: 4, kind: input, shape index: {}]
  %s5 = inlined_call_operand.vmem [shape: f32[36,4], index: 5, kind: input, shape index: {}]
  %s6 = inlined_call_operand.vmem [shape: f32[1,4], index: 6, kind: input, shape index: {}]
  %s7 = inlined_call_operand.vmem [shape: f32[8,8], index: 7, kind: input, shape index: {}]
  %s8 = inlined_call_operand.vmem [shape: f32[1,8], index: 8, kind: input, shape index: {}]
  %s9 = inlined_call_operand.vmem [shape: f32[2,16,16,8], index: 9, kind: output, shape index: {}]
  %s10 = sld [smem:[#allocation0]]
  $region69: #{tpu_custom_call.1} parent=0
    _
  %s12 = ssub.s32 1, %s10
  %s13 = scalar_select 0, %s12, %s10
  loop: start=0, step=1, limit=4
  $region2: #{tpu_custom_call.1} parent=0 // loop_pre_header
    _
  $region3: #{tpu_custom_call.1} parent=0 // loop_header
    %s15 = sphi 0, %s19
    %p16 = scmp.ge.s32.totalorder %s15, 4
    %s25 = sphi 0, %s27
    %s28 = sphi 0, %s25
    %s29 = sphi 0, %s28
    %s45 = sphi 0, %s29
    %s49 = sphi 0, %s49
    %s51 = sphi 0, %s49
    %s52 = sphi 0, %s51
    %s66 = sphi 0, %s52
    %s70 = sphi 0, %s70
    %s72 = sphi 0, %s70
    %s73 = sphi 0, %s72
    %s87 = sphi 0, %s73
    %s91 = sphi 0, %s91
    %s93 = sphi 0, %s91
    %s94 = sphi 0, %s93
    %s108 = sphi 0, %s94
    %s112 = sphi 0, %s112
    %s114 = sphi 0, %s112
    %s115 = sphi 0, %s114
    %s129 = sphi 0, %s115
    %s133 = sphi 0, %s133
    %s135 = sphi 0, %s133
    %s136 = sphi 0, %s135
    %s150 = sphi 0, %s136
    %s154 = sphi 0, %s154
    %s156 = sphi 0, %s154
    %s157 = sphi 0, %s156
    %s171 = sphi 0, %s157
    %s175 = sphi 0, %s175
    %s177 = sphi 0, %s175
    %s178 = sphi 0, %s177
    %s192 = sphi 0, %s178
    %s196 = sphi 0, %s196
    %s198 = sphi 0, %s196
    %s199 = sphi 0, %s198
    %s213 = sphi 0, %s199
    %s219 = sphi 0, %s221
    %s222 = sphi 0, %s219
    %s223 = sphi 0, %s222
    %s239 = sphi 0, %s223
  $region4: #{tpu_custom_call.1} parent=0 // loop_header_branch
    %18 = sbr.rel (%p16) target = $region8
  $region5: #{tpu_custom_call.1} parent=0 // loop_body
    %s20 = ssub.s32 %s15, 1
    %s21 = ssub.s32 %s15, 2
    %s22 = sadd.s32 %s15, 1
    %s23 = ssub.s32 %s15, %s22
    %p24 = scmp.eq.s32.totalorder %s23, 0
    %s26 = sadd.s32 %s25, 1
    %s27 = scalar_select %p24, %s25, %s26
    %p30 = pneg %p24
    %p31 = scmp.eq.s32.totalorder %s15, 1
    %p32 = por %p30, %p31
    %p33 = scmp.ne.s32.totalorder %s25, %s28
    %p34 = scmp.eq.s32.totalorder %s15, 0
    %p35 = por %p33, %p34
    %p36 = scmp.ne.s32.totalorder %s25, %s28
    %p37 = scmp.eq.s32.totalorder %s20, 1
    %p38 = por %p36, %p37
    %p39 = scmp.ne.s32.totalorder %s28, %s29
    %p40 = scmp.eq.s32.totalorder %s20, 0
    %p41 = por %p39, %p40
    %p42 = scmp.ne.s32.totalorder %s28, %s29
    %p43 = scmp.eq.s32.totalorder %s21, 1
    %p44 = por %p42, %p43
    %p46 = scmp.ne.s32.totalorder %s29, %s45
    %p47 = scmp.eq.s32.totalorder %s21, 0
    %p48 = por %p46, %p47
    %s50 = sadd.s32 %s49, 1
    %p53 = scmp.eq.s32.totalorder %s15, 1
    %p54 = scmp.ne.s32.totalorder %s49, %s51
    %p55 = scmp.eq.s32.totalorder %s15, 0
    %p56 = por %p54, %p55
    %p57 = scmp.ne.s32.totalorder %s49, %s51
    %p58 = scmp.eq.s32.totalorder %s20, 1
    %p59 = por %p57, %p58
    %p60 = scmp.ne.s32.totalorder %s51, %s52
    %p61 = scmp.eq.s32.totalorder %s20, 0
    %p62 = por %p60, %p61
    %p63 = scmp.ne.s32.totalorder %s51, %s52
    %p64 = scmp.eq.s32.totalorder %s21, 1
    %p65 = por %p63, %p64
    %p67 = scmp.ne.s32.totalorder %s52, %s66
    %p68 = scmp.eq.s32.totalorder %s21, 0
    %p69 = por %p67, %p68
    %s71 = sadd.s32 %s70, 1
    %p74 = scmp.eq.s32.totalorder %s15, 1
    %p75 = scmp.ne.s32.totalorder %s70, %s72
    %p76 = scmp.eq.s32.totalorder %s15, 0
    %p77 = por %p75, %p76
    %p78 = scmp.ne.s32.totalorder %s70, %s72
    %p79 = scmp.eq.s32.totalorder %s20, 1
    %p80 = por %p78, %p79
    %p81 = scmp.ne.s32.totalorder %s72, %s73
    %p82 = scmp.eq.s32.totalorder %s20, 0
    %p83 = por %p81, %p82
    %p84 = scmp.ne.s32.totalorder %s72, %s73
    %p85 = scmp.eq.s32.totalorder %s21, 1
    %p86 = por %p84, %p85
    %p88 = scmp.ne.s32.totalorder %s73, %s87
    %p89 = scmp.eq.s32.totalorder %s21, 0
    %p90 = por %p88, %p89
    %s92 = sadd.s32 %s91, 1
    %p95 = scmp.eq.s32.totalorder %s15, 1
    %p96 = scmp.ne.s32.totalorder %s91, %s93
    %p97 = scmp.eq.s32.totalorder %s15, 0
    %p98 = por %p96, %p97
    %p99 = scmp.ne.s32.totalorder %s91, %s93
    %p100 = scmp.eq.s32.totalorder %s20, 1
    %p101 = por %p99, %p100
    %p102 = scmp.ne.s32.totalorder %s93, %s94
    %p103 = scmp.eq.s32.totalorder %s20, 0
    %p104 = por %p102, %p103
    %p105 = scmp.ne.s32.totalorder %s93, %s94
    %p106 = scmp.eq.s32.totalorder %s21, 1
    %p107 = por %p105, %p106
    %p109 = scmp.ne.s32.totalorder %s94, %s108
    %p110 = scmp.eq.s32.totalorder %s21, 0
    %p111 = por %p109, %p110
    %s113 = sadd.s32 %s112, 1
    %p116 = scmp.eq.s32.totalorder %s15, 1
    %p117 = scmp.ne.s32.totalorder %s112, %s114
    %p118 = scmp.eq.s32.totalorder %s15, 0
    %p119 = por %p117, %p118
    %p120 = scmp.ne.s32.totalorder %s112, %s114
    %p121 = scmp.eq.s32.totalorder %s20, 1
    %p122 = por %p120, %p121
    %p123 = scmp.ne.s32.totalorder %s114, %s115
    %p124 = scmp.eq.s32.totalorder %s20, 0
    %p125 = por %p123, %p124
    %p126 = scmp.ne.s32.totalorder %s114, %s115
    %p127 = scmp.eq.s32.totalorder %s21, 1
    %p128 = por %p126, %p127
    %p130 = scmp.ne.s32.totalorder %s115, %s129
    %p131 = scmp.eq.s32.totalorder %s21, 0
    %p132 = por %p130, %p131
    %s134 = sadd.s32 %s133, 1
    %p137 = scmp.eq.s32.totalorder %s15, 1
    %p138 = scmp.ne.s32.totalorder %s133, %s135
    %p139 = scmp.eq.s32.totalorder %s15, 0
    %p140 = por %p138, %p139
    %p141 = scmp.ne.s32.totalorder %s133, %s135
    %p142 = scmp.eq.s32.totalorder %s20, 1
    %p143 = por %p141, %p142
    %p144 = scmp.ne.s32.totalorder %s135, %s136
    %p145 = scmp.eq.s32.totalorder %s20, 0
    %p146 = por %p144, %p145
    %p147 = scmp.ne.s32.totalorder %s135, %s136
    %p148 = scmp.eq.s32.totalorder %s21, 1
    %p149 = por %p147, %p148
    %p151 = scmp.ne.s32.totalorder %s136, %s150
    %p152 = scmp.eq.s32.totalorder %s21, 0
    %p153 = por %p151, %p152
    %s155 = sadd.s32 %s154, 1
    %p158 = scmp.eq.s32.totalorder %s15, 1
    %p159 = scmp.ne.s32.totalorder %s154, %s156
    %p160 = scmp.eq.s32.totalorder %s15, 0
    %p161 = por %p159, %p160
    %p162 = scmp.ne.s32.totalorder %s154, %s156
    %p163 = scmp.eq.s32.totalorder %s20, 1
    %p164 = por %p162, %p163
    %p165 = scmp.ne.s32.totalorder %s156, %s157
    %p166 = scmp.eq.s32.totalorder %s20, 0
    %p167 = por %p165, %p166
    %p168 = scmp.ne.s32.totalorder %s156, %s157
    %p169 = scmp.eq.s32.totalorder %s21, 1
    %p170 = por %p168, %p169
    %p172 = scmp.ne.s32.totalorder %s157, %s171
    %p173 = scmp.eq.s32.totalorder %s21, 0
    %p174 = por %p172, %p173
    %s176 = sadd.s32 %s175, 1
    %p179 = scmp.eq.s32.totalorder %s15, 1
    %p180 = scmp.ne.s32.totalorder %s175, %s177
    %p181 = scmp.eq.s32.totalorder %s15, 0
    %p182 = por %p180, %p181
    %p183 = scmp.ne.s32.totalorder %s175, %s177
    %p184 = scmp.eq.s32.totalorder %s20, 1
    %p185 = por %p183, %p184
    %p186 = scmp.ne.s32.totalorder %s177, %s178
    %p187 = scmp.eq.s32.totalorder %s20, 0
    %p188 = por %p186, %p187
    %p189 = scmp.ne.s32.totalorder %s177, %s178
    %p190 = scmp.eq.s32.totalorder %s21, 1
    %p191 = por %p189, %p190
    %p193 = scmp.ne.s32.totalorder %s178, %s192
    %p194 = scmp.eq.s32.totalorder %s21, 0
    %p195 = por %p193, %p194
    %s197 = sadd.s32 %s196, 1
    %p200 = scmp.eq.s32.totalorder %s15, 1
    %p201 = scmp.ne.s32.totalorder %s196, %s198
    %p202 = scmp.eq.s32.totalorder %s15, 0
    %p203 = por %p201, %p202
    %p204 = scmp.ne.s32.totalorder %s196, %s198
    %p205 = scmp.eq.s32.totalorder %s20, 1
    %p206 = por %p204, %p205
    %p207 = scmp.ne.s32.totalorder %s198, %s199
    %p208 = scmp.eq.s32.totalorder %s20, 0
    %p209 = por %p207, %p208
    %p210 = scmp.ne.s32.totalorder %s198, %s199
    %p211 = scmp.eq.s32.totalorder %s21, 1
    %p212 = por %p210, %p211
    %p214 = scmp.ne.s32.totalorder %s199, %s213
    %p215 = scmp.eq.s32.totalorder %s21, 0
    %p216 = por %p214, %p215
    %s217 = ssub.s32 %s15, %s22
    %p218 = scmp.eq.s32.totalorder %s217, 0
    %s220 = sadd.s32 %s219, 1
    %s221 = scalar_select %p218, %s219, %s220
    %p224 = pneg %p218
    %p225 = scmp.eq.s32.totalorder %s15, 1
    %p226 = por %p224, %p225
    %p227 = scmp.ne.s32.totalorder %s219, %s222
    %p228 = scmp.eq.s32.totalorder %s15, 0
    %p229 = por %p227, %p228
    %p230 = scmp.ne.s32.totalorder %s219, %s222
    %p231 = scmp.eq.s32.totalorder %s20, 1
    %p232 = por %p230, %p231
    %p233 = scmp.ne.s32.totalorder %s222, %s223
    %p234 = scmp.eq.s32.totalorder %s20, 0
    %p235 = por %p233, %p234
    %p236 = scmp.ne.s32.totalorder %s222, %s223
    %p237 = scmp.eq.s32.totalorder %s21, 1
    %p238 = por %p236, %p237
    %p240 = scmp.ne.s32.totalorder %s223, %s239
    %p241 = scmp.eq.s32.totalorder %s21, 0
    %p242 = por %p240, %p241
    %p243 = scmp.le.s32.totalorder 1, %s15
    %p244 = scmp.lt.s32.totalorder %s15, 3
    %p245 = pnand %p243, %p244
    %p246 = pneg %p245
    // Predicated region
    $region9: #{tpu_custom_call.1} parent=5 // pred_check
      _
    $region10: #{tpu_custom_call.1} parent=5 // pred_check_branch
      %248 = sbr.rel (%p245) target = $region12
    $region11: #{tpu_custom_call.1} parent=5 // pred_region
      %s249 = ssub.s32 %s15, 1
      // Predicated region
      $region13: #{tpu_custom_call.1} parent=11 // pred_check
        %p250 = pneg %p62
      $region14: #{tpu_custom_call.1} parent=11 // pred_check_branch
        %252 = sbr.rel (%p250) target = $region16
      $region15: #{tpu_custom_call.1} parent=11 // pred_region
        _
      $region16: #{tpu_custom_call.1} parent=11 // pred_fallthru
        _
      // Predicated region
      $region17: #{tpu_custom_call.1} parent=11 // pred_check
        %p253 = pneg %p83
      $region18: #{tpu_custom_call.1} parent=11 // pred_check_branch
        %255 = sbr.rel (%p253) target = $region20
      $region19: #{tpu_custom_call.1} parent=11 // pred_region
        _
      $region20: #{tpu_custom_call.1} parent=11 // pred_fallthru
        _
      // Predicated region
      $region21: #{tpu_custom_call.1} parent=11 // pred_check
        %p256 = pneg %p104
      $region22: #{tpu_custom_call.1} parent=11 // pred_check_branch
        %258 = sbr.rel (%p256) target = $region24
      $region23: #{tpu_custom_call.1} parent=11 // pred_region
        _
      $region24: #{tpu_custom_call.1} parent=11 // pred_fallthru
        _
      // Predicated region
      $region25: #{tpu_custom_call.1} parent=11 // pred_check
        %p259 = pneg %p125
      $region26: #{tpu_custom_call.1} parent=11 // pred_check_branch
        %261 = sbr.rel (%p259) target = $region28
      $region27: #{tpu_custom_call.1} parent=11 // pred_region
        _
      $region28: #{tpu_custom_call.1} parent=11 // pred_fallthru
        _
      // Predicated region
      $region29: #{tpu_custom_call.1} parent=11 // pred_check
        %p262 = pneg %p146
      $region30: #{tpu_custom_call.1} parent=11 // pred_check_branch
        %264 = sbr.rel (%p262) target = $region32
      $region31: #{tpu_custom_call.1} parent=11 // pred_region
        _
      $region32: #{tpu_custom_call.1} parent=11 // pred_fallthru
        _
      // Predicated region
      $region33: #{tpu_custom_call.1} parent=11 // pred_check
        %p265 = pneg %p167
      $region34: #{tpu_custom_call.1} parent=11 // pred_check_branch
        %267 = sbr.rel (%p265) target = $region36
      $region35: #{tpu_custom_call.1} parent=11 // pred_region
        _
      $region36: #{tpu_custom_call.1} parent=11 // pred_fallthru
        _
      // Predicated region
      $region37: #{tpu_custom_call.1} parent=11 // pred_check
        %p268 = pneg %p188
      $region38: #{tpu_custom_call.1} parent=11 // pred_check_branch
        %270 = sbr.rel (%p268) target = $region40
      $region39: #{tpu_custom_call.1} parent=11 // pred_region
        _
      $region40: #{tpu_custom_call.1} parent=11 // pred_fallthru
        _
      // Predicated region
      $region41: #{tpu_custom_call.1} parent=11 // pred_check
        %p271 = pneg %p209
      $region42: #{tpu_custom_call.1} parent=11 // pred_check_branch
        %273 = sbr.rel (%p271) target = $region44
      $region43: #{tpu_custom_call.1} parent=11 // pred_region
        _
      $region44: #{tpu_custom_call.1} parent=11 // pred_fallthru
        _
    $region12: #{tpu_custom_call.1} parent=5 // pred_fallthru
      _
    %p274 = scmp.lt.s32.totalorder %s15, 2
    // Predicated region
    $region45: #{tpu_custom_call.1} parent=5 // pred_check
      %p275 = pneg %p274
    $region46: #{tpu_custom_call.1} parent=5 // pred_check_branch
      %277 = sbr.rel (%p275) target = $region48
    $region47: #{tpu_custom_call.1} parent=5 // pred_region
      // Predicated region
      $region49: #{tpu_custom_call.1} parent=47 // pred_check
        %p278 = pneg %p35
      $region50: #{tpu_custom_call.1} parent=47 // pred_check_branch
        %280 = sbr.rel (%p278) target = $region52
      $region51: #{tpu_custom_call.1} parent=47 // pred_region
        %p281 = scmp.lt.s32.totalorder %s15, 1
        %s282 = scalar_select %p281, %s15, 1
        %s283 = smul.addr %s282, 32
        %s284 = smul.addr %s283, 8
        %s285 = scalar_lea.vmem %s0, %s284
      $region52: #{tpu_custom_call.1} parent=47 // pred_fallthru
        _
    $region48: #{tpu_custom_call.1} parent=5 // pred_fallthru
      _
    %p286 = scmp.le.s32.totalorder 1, %s15
    %p287 = scmp.lt.s32.totalorder %s15, 3
    %p288 = pnand %p286, %p287
    %p289 = pneg %p288
    // Predicated region
    $region53: #{tpu_custom_call.1} parent=5 // pred_check
      _
    $region54: #{tpu_custom_call.1} parent=5 // pred_check_branch
      %291 = sbr.rel (%p288) target = $region56
    $region55: #{tpu_custom_call.1} parent=5 // pred_region
      %s292 = ssub.s32 %s15, 1
      %p293 = scmp.lt.s32.totalorder %s20, 1
      %s294 = scalar_select %p293, %s20, 1
      %s295 = smul.addr %s294, 32
      %s296 = smul.addr %s295, 8
      %s297 = scalar_lea.vmem %s0, %s296
      %p298 = pneg %p41
      %p299 = pneg %p38
      %p300 = pneg %p62
      %p301 = pneg %p59
      %p302 = pneg %p83
      %p303 = pneg %p80
      %p304 = pneg %p104
      %p305 = pneg %p101
      %p306 = pneg %p125
      %p307 = pneg %p122
      %p308 = pneg %p146
      %p309 = pneg %p143
      %p310 = pneg %p167
      %p311 = pneg %p164
      %p312 = pneg %p188
      %p313 = pneg %p185
      %p314 = pneg %p209
      %p315 = pneg %p206
      %p316 = pneg %p235
      %p317 = pneg %p232
      %p318 = scmp.lt.s32.totalorder %s20, 1
      %s319 = scalar_select %p318, %s20, 1
      %s320 = smul.addr %s319, 32
      %s321 = smul.addr %s320, 8
      %s322 = scalar_lea.vmem %s9, %s321
      %p323 = scmp.lt.s32.totalorder %s20, 1
      %s324 = scalar_select %p323, %s20, 1
      %s325 = smul.addr %s324, 32
      %s326 = smul.addr %s325, 8
      %s327 = scalar_lea.vmem %s0, %s326
      %p328 = scmp.lt.s32.totalorder %s20, 1
      %s329 = scalar_select %p328, %s20, 1
      %s330 = smul.addr %s329, 32
      %s331 = smul.addr %s330, 8
      %s332 = scalar_lea.vmem %s9, %s331
      %v333 = vld [vmem:[%s327] sm:$0xff]
      %v334 = vld [vmem:[%s327 + $0x8] sm:$0xff]
      %v335 = vld [vmem:[%s327 + $0x10] sm:$0xff]
      %v336 = vld [vmem:[%s327 + $0x18] sm:$0xff]
      %v337 = vld [vmem:[%s327 + $0x20] sm:$0xff]
      %v338 = vld [vmem:[%s327 + $0x28] sm:$0xff]
      %v339 = vld [vmem:[%s327 + $0x30] sm:$0xff]
      %v340 = vld [vmem:[%s327 + $0x38] sm:$0xff]
      %v341 = vld [vmem:[%s327 + $0x40] sm:$0xff]
      %v342 = vld [vmem:[%s327 + $0x48] sm:$0xff]
      %v343 = vld [vmem:[%s327 + $0x50] sm:$0xff]
      %v344 = vld [vmem:[%s327 + $0x58] sm:$0xff]
      %v345 = vld [vmem:[%s327 + $0x60] sm:$0xff]
      %v346 = vld [vmem:[%s327 + $0x68] sm:$0xff]
      %v347 = vld [vmem:[%s327 + $0x70] sm:$0xff]
      %v348 = vld [vmem:[%s327 + $0x78] sm:$0xff]
      %v349 = vld [vmem:[%s327 + $0x80] sm:$0xff]
      %v350 = vld [vmem:[%s327 + $0x88] sm:$0xff]
      %v351 = vld [vmem:[%s327 + $0x90] sm:$0xff]
      %v352 = vld [vmem:[%s327 + $0x98] sm:$0xff]
      %v353 = vld [vmem:[%s327 + $0xa0] sm:$0xff]
      %v354 = vld [vmem:[%s327 + $0xa8] sm:$0xff]
      %v355 = vld [vmem:[%s327 + $0xb0] sm:$0xff]
      %v356 = vld [vmem:[%s327 + $0xb8] sm:$0xff]
      %v357 = vld [vmem:[%s327 + $0xc0] sm:$0xff]
      %v358 = vld [vmem:[%s327 + $0xc8] sm:$0xff]
      %v359 = vld [vmem:[%s327 + $0xd0] sm:$0xff]
      %v360 = vld [vmem:[%s327 + $0xd8] sm:$0xff]
      %v361 = vld [vmem:[%s327 + $0xe0] sm:$0xff]
      %v362 = vld [vmem:[%s327 + $0xe8] sm:$0xff]
      %v363 = vld [vmem:[%s327 + $0xf0] sm:$0xff]
      %v364 = vld [vmem:[%s327 + $0xf8] sm:$0xff]
      %v365 = vld [vmem:[%s1] sm:$0x1]
      %v367 = vlaneseq
      %v368 = vshrl.u32 %v367, 7
      %v369 = vsub.s32 0, %v368
      %v370 = vrot.slane %v365, %v369
      %v372 = vmul.f32 %v333, %v370
      %v373 = vmul.f32 %v334, %v370
      %v374 = vmul.f32 %v335, %v370
      %v375 = vmul.f32 %v336, %v370
      %v376 = vmul.f32 %v337, %v370
      %v377 = vmul.f32 %v338, %v370
      %v378 = vmul.f32 %v339, %v370
      %v379 = vmul.f32 %v340, %v370
      %v380 = vmul.f32 %v341, %v370
      %v381 = vmul.f32 %v342, %v370
      %v382 = vmul.f32 %v343, %v370
      %v383 = vmul.f32 %v344, %v370
      %v384 = vmul.f32 %v345, %v370
      %v385 = vmul.f32 %v346, %v370
      %v386 = vmul.f32 %v347, %v370
      %v387 = vmul.f32 %v348, %v370
      %v388 = vmul.f32 %v349, %v370
      %v389 = vmul.f32 %v350, %v370
      %v390 = vmul.f32 %v351, %v370
      %v391 = vmul.f32 %v352, %v370
      %v392 = vmul.f32 %v353, %v370
      %v393 = vmul.f32 %v354, %v370
      %v394 = vmul.f32 %v355, %v370
      %v395 = vmul.f32 %v356, %v370
      %v396 = vmul.f32 %v357, %v370
      %v397 = vmul.f32 %v358, %v370
      %v398 = vmul.f32 %v359, %v370
      %v399 = vmul.f32 %v360, %v370
      %v400 = vmul.f32 %v361, %v370
      %v401 = vmul.f32 %v362, %v370
      %v402 = vmul.f32 %v363, %v370
      %v403 = vmul.f32 %v364, %v370
      %v404 = vld [vmem:[%s2] sm:$0x1]
      %v406 = vlaneseq
      %v407 = vshrl.u32 %v406, 7
      %v408 = vsub.s32 0, %v407
      %v409 = vrot.slane %v404, %v408
      %v411 = vadd.f32 %v372, %v409
      %v412 = vadd.f32 %v373, %v409
      %v413 = vadd.f32 %v374, %v409
      %v414 = vadd.f32 %v375, %v409
      %v415 = vadd.f32 %v376, %v409
      %v416 = vadd.f32 %v377, %v409
      %v417 = vadd.f32 %v378, %v409
      %v418 = vadd.f32 %v379, %v409
      %v419 = vadd.f32 %v380, %v409
      %v420 = vadd.f32 %v381, %v409
      %v421 = vadd.f32 %v382, %v409
      %v422 = vadd.f32 %v383, %v409
      %v423 = vadd.f32 %v384, %v409
      %v424 = vadd.f32 %v385, %v409
      %v425 = vadd.f32 %v386, %v409
      %v426 = vadd.f32 %v387, %v409
      %v427 = vadd.f32 %v388, %v409
      %v428 = vadd.f32 %v389, %v409
      %v429 = vadd.f32 %v390, %v409
      %v430 = vadd.f32 %v391, %v409
      %v431 = vadd.f32 %v392, %v409
      %v432 = vadd.f32 %v393, %v409
      %v433 = vadd.f32 %v394, %v409
      %v434 = vadd.f32 %v395, %v409
      %v435 = vadd.f32 %v396, %v409
      %v436 = vadd.f32 %v397, %v409
      %v437 = vadd.f32 %v398, %v409
      %v438 = vadd.f32 %v399, %v409
      %v439 = vadd.f32 %v400, %v409
      %v440 = vadd.f32 %v401, %v409
      %v441 = vadd.f32 %v402, %v409
      %v442 = vadd.f32 %v403, %v409
      %v443 = vmax.f32 %v411, 0.0
      %v444 = vmax.f32 %v412, 0.0
      %v445 = vmax.f32 %v413, 0.0
      %v446 = vmax.f32 %v414, 0.0
      %v447 = vmax.f32 %v415, 0.0
      %v448 = vmax.f32 %v416, 0.0
      %v449 = vmax.f32 %v417, 0.0
      %v450 = vmax.f32 %v418, 0.0
      %v451 = vmax.f32 %v419, 0.0
      %v452 = vmax.f32 %v420, 0.0
      %v453 = vmax.f32 %v421, 0.0
      %v454 = vmax.f32 %v422, 0.0
      %v455 = vmax.f32 %v423, 0.0
      %v456 = vmax.f32 %v424, 0.0
      %v457 = vmax.f32 %v425, 0.0
      %v458 = vmax.f32 %v426, 0.0
      %v459 = vmax.f32 %v427, 0.0
      %v460 = vmax.f32 %v428, 0.0
      %v461 = vmax.f32 %v429, 0.0
      %v462 = vmax.f32 %v430, 0.0
      %v463 = vmax.f32 %v431, 0.0
      %v464 = vmax.f32 %v432, 0.0
      %v465 = vmax.f32 %v433, 0.0
      %v466 = vmax.f32 %v434, 0.0
      %v467 = vmax.f32 %v435, 0.0
      %v468 = vmax.f32 %v436, 0.0
      %v469 = vmax.f32 %v437, 0.0
      %v470 = vmax.f32 %v438, 0.0
      %v471 = vmax.f32 %v439, 0.0
      %v472 = vmax.f32 %v440, 0.0
      %v473 = vmax.f32 %v441, 0.0
      %v474 = vmax.f32 %v442, 0.0
      %v475 = vld [vmem:[%s3] sm:$0xf]
      %v476 = vld [vmem:[%s4] sm:$0x1]
      %v478 = vlaneseq
      %v479 = vshrl.u32 %v478, 7
      %v480 = vsub.s32 0, %v479
      %v481 = vrot.slane %v476, %v480
      %vm483 = vcmask 31744
      %v485 = vsel %vm483, %v443, 0
      %v488 = vsel %vm483, %v444, 0
      %v491 = vsel %vm483, %v445, 0
      %v494 = vsel %vm483, %v446, 0
      %v497 = vsel %vm483, %v447, 0
      %v500 = vsel %vm483, %v448, 0
      %v503 = vsel %vm483, %v449, 0
      %v506 = vsel %vm483, %v450, 0
      %v509 = vsel %vm483, %v451, 0
      %v512 = vsel %vm483, %v452, 0
      %v515 = vsel %vm483, %v453, 0
      %v518 = vsel %vm483, %v454, 0
      %v521 = vsel %vm483, %v455, 0
      %v524 = vsel %vm483, %v456, 0
      %v527 = vsel %vm483, %v457, 0
      %v530 = vsel %vm483, %v458, 0
      %v533 = vsel %vm483, %v459, 0
      %v536 = vsel %vm483, %v460, 0
      %v539 = vsel %vm483, %v461, 0
      %v542 = vsel %vm483, %v462, 0
      %v545 = vsel %vm483, %v463, 0
      %v548 = vsel %vm483, %v464, 0
      %v551 = vsel %vm483, %v465, 0
      %v554 = vsel %vm483, %v466, 0
      %v557 = vsel %vm483, %v467, 0
      %v560 = vsel %vm483, %v468, 0
      %v563 = vsel %vm483, %v469, 0
      %v566 = vsel %vm483, %v470, 0
      %v569 = vsel %vm483, %v471, 0
      %v572 = vsel %vm483, %v472, 0
      %v575 = vsel %vm483, %v473, 0
      %v578 = vsel %vm483, %v474, 0
      %vm580 = vcmask 1043456
      %v582 = vsel %vm580, %v475, 0
      %584 = vmatprep.subr.mxu0 0.0
      %585 = vmatpush1.msra.mxu0 %v582
      %586 = vmatprep.subr.mxu0 0.0
      %587 = vmatpush1.msra.mxu0 0.0
      %588 = vmatprep.subr.mxu0 0.0
      %589 = vmatpush1.msra.mxu0 0.0
      %590 = vmatprep.subr.mxu0 0.0
      %591 = vmatpush1.msra.mxu0 0.0
      %592 = vmatprep.subr.mxu0 0.0
      %593 = vmatpush1.msra.mxu0 0.0
      %594 = vmatprep.subr.mxu0 0.0
      %595 = vmatpush1.msra.mxu0 0.0
      %596 = vmatprep.subr.mxu0 0.0
      %597 = vmatpush1.msra.mxu0 0.0
      %598 = vmatprep.subr.mxu0 0.0
      %599 = vmatpush1.msra.mxu0 0.0
      %600 = vmatprep.subr.mxu0 0.0
      %601 = vmatpush1.msra.mxu0 0.0
      %602 = vmatprep.subr.mxu0 0.0
      %603 = vmatpush1.msra.mxu0 0.0
      %604 = vmatprep.subr.mxu0 0.0
      %605 = vmatpush1.msra.mxu0 0.0
      %606 = vmatprep.subr.mxu0 0.0
      %607 = vmatpush1.msra.mxu0 0.0
      %608 = vmatprep.subr.mxu0 0.0
      %609 = vmatpush1.msra.mxu0 0.0
      %610 = vmatprep.subr.mxu0 0.0
      %611 = vmatpush1.msra.mxu0 0.0
      %612 = vmatprep.subr.mxu0 0.0
      %613 = vmatpush1.msra.mxu0 0.0
      %614 = vmatprep.subr.mxu0 0.0
      %615 = vmatpush1.msra.mxu0 0.0
      %616 = vmatprep.subr.mxu0 0.0
      %617 = vmatpush1.msra.mxu0 0.0
      %618 = vmatprep.subr.mxu0 0.0
      %619 = vmatpush1.msra.mxu0 0.0
      %620 = vmatprep.subr.mxu0 0.0
      %621 = vmatpush1.msra.mxu0 0.0
      %622 = vmatprep.subr.mxu0 0.0
      %623 = vmatpush1.msra.mxu0 0.0
      %624 = vmatprep.subr.mxu0 0.0
      %625 = vmatpush1.msra.mxu0 0.0
      %626 = vmatprep.subr.mxu0 0.0
      %627 = vmatpush1.msra.mxu0 0.0
      %628 = vmatprep.subr.mxu0 0.0
      %629 = vmatpush1.msra.mxu0 0.0
      %630 = vmatprep.subr.mxu0 0.0
      %631 = vmatpush1.msra.mxu0 0.0
      %632 = vmatprep.subr.mxu0 0.0
      %633 = vmatpush1.msra.mxu0 0.0
      %634 = vmatprep.subr.mxu0 0.0
      %635 = vmatpush1.msra.mxu0 0.0
      %636 = vmatprep.subr.mxu0 0.0
      %637 = vmatpush1.msra.mxu0 0.0
      %638 = vmatprep.subr.mxu0 0.0
      %639 = vmatpush1.msra.mxu0 0.0
      %640 = vmatprep.subr.mxu0 0.0
      %641 = vmatpush1.msra.mxu0 0.0
      %642 = vmatprep.subr.mxu0 0.0
      %643 = vmatpush1.msra.mxu0 0.0
      %644 = vmatprep.subr.mxu0 0.0
      %645 = vmatpush1.msra.mxu0 0.0
      %646 = vmatprep.subr.mxu0 0.0
      %647 = vmatpush1.msra.mxu0 0.0
      %648 = vmatprep.mubr.f32.mxu0 0.0
      %649 = vmatmul.mubr.f32.gmra.mrb[0].mxu0 %v485
      %v650 = vpop.f32.mrb[0].mxu0
      %v651 = vadd.f32 %v481, %v650
      %v652 = vpop.f32.mrb[0].mxu0
      %653 = vmatprep.mubr.f32.mxu0 0.0
      %654 = vmatmul.mubr.f32.gmra.mrb[0].mxu0 %v488
      %v655 = vpop.f32.mrb[0].mxu0
      %v656 = vadd.f32 %v481, %v655
      %v657 = vpop.f32.mrb[0].mxu0
      %658 = vmatprep.mubr.f32.mxu0 0.0
      %659 = vmatmul.mubr.f32.gmra.mrb[0].mxu0 %v491
      %v660 = vpop.f32.mrb[0].mxu0
      %v661 = vadd.f32 %v481, %v660
      %v662 = vpop.f32.mrb[0].mxu0
      %663 = vmatprep.mubr.f32.mxu0 0.0
      %664 = vmatmul.mubr.f32.gmra.mrb[0].mxu0 %v494
      %v665 = vpop.f32.mrb[0].mxu0
      %v666 = vadd.f32 %v481, %v665
      %v667 = vpop.f32.mrb[0].mxu0
      %668 = vmatprep.mubr.f32.mxu0 0.0
      %669 = vmatmul.mubr.f32.gmra.mrb[0].mxu0 %v497
      %v670 = vpop.f32.mrb[0].mxu0
      %v671 = vadd.f32 %v481, %v670
      %v672 = vpop.f32.mrb[0].mxu0
      %673 = vmatprep.mubr.f32.mxu0 0.0
      %674 = vmatmul.mubr.f32.gmra.mrb[0].mxu0 %v500
      %v675 = vpop.f32.mrb[0].mxu0
      %v676 = vadd.f32 %v481, %v675
      %v677 = vpop.f32.mrb[0].mxu0
      %678 = vmatprep.mubr.f32.mxu0 0.0
      %679 = vmatmul.mubr.f32.gmra.mrb[0].mxu0 %v503
      %v680 = vpop.f32.mrb[0].mxu0
      %v681 = vadd.f32 %v481, %v680
      %v682 = vpop.f32.mrb[0].mxu0
      %683 = vmatprep.mubr.f32.mxu0 0.0
      %684 = vmatmul.mubr.f32.gmra.mrb[0].mxu0 %v506
      %v685 = vpop.f32.mrb[0].mxu0
      %v686 = vadd.f32 %v481, %v685
      %v687 = vpop.f32.mrb[0].mxu0
      %688 = vmatprep.mubr.f32.mxu0 0.0
      %689 = vmatmul.mubr.f32.gmra.mrb[0].mxu0 %v509
      %v690 = vpop.f32.mrb[0].mxu0
      %v691 = vadd.f32 %v481, %v690
      %v692 = vpop.f32.mrb[0].mxu0
      %693 = vmatprep.mubr.f32.mxu0 0.0
      %694 = vmatmul.mubr.f32.gmra.mrb[0].mxu0 %v512
      %v695 = vpop.f32.mrb[0].mxu0
      %v696 = vadd.f32 %v481, %v695
      %v697 = vpop.f32.mrb[0].mxu0
      %698 = vmatprep.mubr.f32.mxu0 0.0
      %699 = vmatmul.mubr.f32.gmra.mrb[0].mxu0 %v515
      %v700 = vpop.f32.mrb[0].mxu0
      %v701 = vadd.f32 %v481, %v700
      %v702 = vpop.f32.mrb[0].mxu0
      %703 = vmatprep.mubr.f32.mxu0 0.0
      %704 = vmatmul.mubr.f32.gmra.mrb[0].mxu0 %v518
      %v705 = vpop.f32.mrb[0].mxu0
      %v706 = vadd.f32 %v481, %v705
      %v707 = vpop.f32.mrb[0].mxu0
      %708 = vmatprep.mubr.f32.mxu0 0.0
      %709 = vmatmul.mubr.f32.gmra.mrb[0].mxu0 %v521
      %v710 = vpop.f32.mrb[0].mxu0
      %v711 = vadd.f32 %v481, %v710
      %v712 = vpop.f32.mrb[0].mxu0
      %713 = vmatprep.mubr.f32.mxu0 0.0
      %714 = vmatmul.mubr.f32.gmra.mrb[0].mxu0 %v524
      %v715 = vpop.f32.mrb[0].mxu0
      %v716 = vadd.f32 %v481, %v715
      %v717 = vpop.f32.mrb[0].mxu0
      %718 = vmatprep.mubr.f32.mxu0 0.0
      %719 = vmatmul.mubr.f32.gmra.mrb[0].mxu0 %v527
      %v720 = vpop.f32.mrb[0].mxu0
      %v721 = vadd.f32 %v481, %v720
      %v722 = vpop.f32.mrb[0].mxu0
      %723 = vmatprep.mubr.f32.mxu0 0.0
      %724 = vmatmul.mubr.f32.gmra.mrb[0].mxu0 %v530
      %v725 = vpop.f32.mrb[0].mxu0
      %v726 = vadd.f32 %v481, %v725
      %v727 = vpop.f32.mrb[0].mxu0
      %728 = vmatprep.mubr.f32.mxu0 0.0
      %729 = vmatmul.mubr.f32.gmra.mrb[0].mxu0 %v533
      %v730 = vpop.f32.mrb[0].mxu0
      %v731 = vadd.f32 %v481, %v730
      %v732 = vpop.f32.mrb[0].mxu0
      %733 = vmatprep.mubr.f32.mxu0 0.0
      %734 = vmatmul.mubr.f32.gmra.mrb[0].mxu0 %v536
      %v735 = vpop.f32.mrb[0].mxu0
      %v736 = vadd.f32 %v481, %v735
      %v737 = vpop.f32.mrb[0].mxu0
      %738 = vmatprep.mubr.f32.mxu0 0.0
      %739 = vmatmul.mubr.f32.gmra.mrb[0].mxu0 %v539
      %v740 = vpop.f32.mrb[0].mxu0
      %v741 = vadd.f32 %v481, %v740
      %v742 = vpop.f32.mrb[0].mxu0
      %743 = vmatprep.mubr.f32.mxu0 0.0
      %744 = vmatmul.mubr.f32.gmra.mrb[0].mxu0 %v542
      %v745 = vpop.f32.mrb[0].mxu0
      %v746 = vadd.f32 %v481, %v745
      %v747 = vpop.f32.mrb[0].mxu0
      %748 = vmatprep.mubr.f32.mxu0 0.0
      %749 = vmatmul.mubr.f32.gmra.mrb[0].mxu0 %v545
      %v750 = vpop.f32.mrb[0].mxu0
      %v751 = vadd.f32 %v481, %v750
      %v752 = vpop.f32.mrb[0].mxu0
      %753 = vmatprep.mubr.f32.mxu0 0.0
      %754 = vmatmul.mubr.f32.gmra.mrb[0].mxu0 %v548
      %v755 = vpop.f32.mrb[0].mxu0
      %v756 = vadd.f32 %v481, %v755
      %v757 = vpop.f32.mrb[0].mxu0
      %758 = vmatprep.mubr.f32.mxu0 0.0
      %759 = vmatmul.mubr.f32.gmra.mrb[0].mxu0 %v551
      %v760 = vpop.f32.mrb[0].mxu0
      %v761 = vadd.f32 %v481, %v760
      %v762 = vpop.f32.mrb[0].mxu0
      %763 = vmatprep.mubr.f32.mxu0 0.0
      %764 = vmatmul.mubr.f32.gmra.mrb[0].mxu0 %v554
      %v765 = vpop.f32.mrb[0].mxu0
      %v766 = vadd.f32 %v481, %v765
      %v767 = vpop.f32.mrb[0].mxu0
      %768 = vmatprep.mubr.f32.mxu0 0.0
      %769 = vmatmul.mubr.f32.gmra.mrb[0].mxu0 %v557
      %v770 = vpop.f32.mrb[0].mxu0
      %v771 = vadd.f32 %v481, %v770
      %v772 = vpop.f32.mrb[0].mxu0
      %773 = vmatprep.mubr.f32.mxu0 0.0
      %774 = vmatmul.mubr.f32.gmra.mrb[0].mxu0 %v560
      %v775 = vpop.f32.mrb[0].mxu0
      %v776 = vadd.f32 %v481, %v775
      %v777 = vpop.f32.mrb[0].mxu0
      %778 = vmatprep.mubr.f32.mxu0 0.0
      %779 = vmatmul.mubr.f32.gmra.mrb[0].mxu0 %v563
      %v780 = vpop.f32.mrb[0].mxu0
      %v781 = vadd.f32 %v481, %v780
      %v782 = vpop.f32.mrb[0].mxu0
      %783 = vmatprep.mubr.f32.mxu0 0.0
      %784 = vmatmul.mubr.f32.gmra.mrb[0].mxu0 %v566
      %v785 = vpop.f32.mrb[0].mxu0
      %v786 = vadd.f32 %v481, %v785
      %v787 = vpop.f32.mrb[0].mxu0
      %788 = vmatprep.mubr.f32.mxu0 0.0
      %789 = vmatmul.mubr.f32.gmra.mrb[0].mxu0 %v569
      %v790 = vpop.f32.mrb[0].mxu0
      %v791 = vadd.f32 %v481, %v790
      %v792 = vpop.f32.mrb[0].mxu0
      %793 = vmatprep.mubr.f32.mxu0 0.0
      %794 = vmatmul.mubr.f32.gmra.mrb[0].mxu0 %v572
      %v795 = vpop.f32.mrb[0].mxu0
      %v796 = vadd.f32 %v481, %v795
      %v797 = vpop.f32.mrb[0].mxu0
      %798 = vmatprep.mubr.f32.mxu0 0.0
      %799 = vmatmul.mubr.f32.gmra.mrb[0].mxu0 %v575
      %v800 = vpop.f32.mrb[0].mxu0
      %v801 = vadd.f32 %v481, %v800
      %v802 = vpop.f32.mrb[0].mxu0
      %803 = vmatprep.mubr.f32.mxu0 0.0
      %804 = vmatmul.mubr.f32.gmra.mrb[0].mxu0 %v578
      %v805 = vpop.f32.mrb[0].mxu0
      %v806 = vadd.f32 %v481, %v805
      %v807 = vpop.f32.mrb[0].mxu0
      %808 = vdwg.mxu0
      %v809 = vmax.f32 %v651, 0.0
      %v810 = vmax.f32 %v656, 0.0
      %v811 = vmax.f32 %v661, 0.0
      %v812 = vmax.f32 %v666, 0.0
      %v813 = vmax.f32 %v671, 0.0
      %v814 = vmax.f32 %v676, 0.0
      %v815 = vmax.f32 %v681, 0.0
      %v816 = vmax.f32 %v686, 0.0
      %v817 = vmax.f32 %v691, 0.0
      %v818 = vmax.f32 %v696, 0.0
      %v819 = vmax.f32 %v701, 0.0
      %v820 = vmax.f32 %v706, 0.0
      %v821 = vmax.f32 %v711, 0.0
      %v822 = vmax.f32 %v716, 0.0
      %v823 = vmax.f32 %v721, 0.0
      %v824 = vmax.f32 %v726, 0.0
      %v825 = vmax.f32 %v731, 0.0
      %v826 = vmax.f32 %v736, 0.0
      %v827 = vmax.f32 %v741, 0.0
      %v828 = vmax.f32 %v746, 0.0
      %v829 = vmax.f32 %v751, 0.0
      %v830 = vmax.f32 %v756, 0.0
      %v831 = vmax.f32 %v761, 0.0
      %v832 = vmax.f32 %v766, 0.0
      %v833 = vmax.f32 %v771, 0.0
      %v834 = vmax.f32 %v776, 0.0
      %v835 = vmax.f32 %v781, 0.0
      %v836 = vmax.f32 %v786, 0.0
      %v837 = vmax.f32 %v791, 0.0
      %v838 = vmax.f32 %v796, 0.0
      %v839 = vmax.f32 %v801, 0.0
      %v840 = vmax.f32 %v806, 0.0
      %vm873 = vcmask 1040384
      %v874 = vrot.slane %v809, 7
      %v875 = vrot.slane %v810, 7
      %v876 = vsel %vm873, %v874, %v875
      %v877 = vrot.slane %v811, 7
      %v878 = vrot.slane %v812, 7
      %v879 = vsel %vm873, %v877, %v878
      %v880 = vrot.slane %v813, 7
      %v881 = vrot.slane %v814, 7
      %v882 = vsel %vm873, %v880, %v881
      %v883 = vrot.slane %v815, 7
      %v884 = vrot.slane %v816, 7
      %v885 = vsel %vm873, %v883, %v884
      %v886 = vrot.slane %v817, 7
      %v887 = vrot.slane %v818, 7
      %v888 = vsel %vm873, %v886, %v887
      %v889 = vrot.slane %v819, 7
      %v890 = vrot.slane %v820, 7
      %v891 = vsel %vm873, %v889, %v890
      %v892 = vrot.slane %v821, 7
      %v893 = vrot.slane %v822, 7
      %v894 = vsel %vm873, %v892, %v893
      %v895 = vrot.slane %v823, 7
      %v896 = vrot.slane %v824, 7
      %v897 = vsel %vm873, %v895, %v896
      %v898 = vrot.slane %v825, 7
      %v899 = vrot.slane %v826, 7
      %v900 = vsel %vm873, %v898, %v899
      %v901 = vrot.slane %v827, 7
      %v902 = vrot.slane %v828, 7
      %v903 = vsel %vm873, %v901, %v902
      %v904 = vrot.slane %v829, 7
      %v905 = vrot.slane %v830, 7
      %v906 = vsel %vm873, %v904, %v905
      %v907 = vrot.slane %v831, 7
      %v908 = vrot.slane %v832, 7
      %v909 = vsel %vm873, %v907, %v908
      %v910 = vrot.slane %v833, 7
      %v911 = vrot.slane %v834, 7
      %v912 = vsel %vm873, %v910, %v911
      %v913 = vrot.slane %v835, 7
      %v914 = vrot.slane %v836, 7
      %v915 = vsel %vm873, %v913, %v914
      %v916 = vrot.slane %v837, 7
      %v917 = vrot.slane %v838, 7
      %v918 = vsel %vm873, %v916, %v917
      %v919 = vrot.slane %v839, 7
      %v920 = vrot.slane %v840, 7
      %v921 = vsel %vm873, %v919, %v920
      %v954 = vsel %vm873, 0.0, %v874
      %v955 = vsel %vm873, 0.0, %v877
      %v956 = vsel %vm873, 0.0, %v880
      %v957 = vsel %vm873, 0.0, %v883
      %v958 = vsel %vm873, 0.0, %v886
      %v959 = vsel %vm873, 0.0, %v889
      %v960 = vsel %vm873, 0.0, %v892
      %v961 = vsel %vm873, 0.0, %v895
      %v962 = vsel %vm873, 0.0, %v898
      %v963 = vsel %vm873, 0.0, %v901
      %v964 = vsel %vm873, 0.0, %v904
      %v965 = vsel %vm873, 0.0, %v907
      %v966 = vsel %vm873, 0.0, %v910
      %v967 = vsel %vm873, 0.0, %v913
      %v968 = vsel %vm873, 0.0, %v916
      %v969 = vsel %vm873, 0.0, %v919
      %vm970 = vcmask 1046528
      %v971 = vrot.slane %v809, 1
      %v972 = vrot.slane %v810, 1
      %v973 = vsel %vm970, %v971, %v972
      %v974 = vrot.slane %v811, 1
      %v975 = vrot.slane %v812, 1
      %v976 = vsel %vm970, %v974, %v975
      %v977 = vrot.slane %v813, 1
      %v978 = vrot.slane %v814, 1
      %v979 = vsel %vm970, %v977, %v978
      %v980 = vrot.slane %v815, 1
      %v981 = vrot.slane %v816, 1
      %v982 = vsel %vm970, %v980, %v981
      %v983 = vrot.slane %v817, 1
      %v984 = vrot.slane %v818, 1
      %v985 = vsel %vm970, %v983, %v984
      %v986 = vrot.slane %v819, 1
      %v987 = vrot.slane %v820, 1
      %v988 = vsel %vm970, %v986, %v987
      %v989 = vrot.slane %v821, 1
      %v990 = vrot.slane %v822, 1
      %v991 = vsel %vm970, %v989, %v990
      %v992 = vrot.slane %v823, 1
      %v993 = vrot.slane %v824, 1
      %v994 = vsel %vm970, %v992, %v993
      %v995 = vrot.slane %v825, 1
      %v996 = vrot.slane %v826, 1
      %v997 = vsel %vm970, %v995, %v996
      %v998 = vrot.slane %v827, 1
      %v999 = vrot.slane %v828, 1
      %v1000 = vsel %vm970, %v998, %v999
      %v1001 = vrot.slane %v829, 1
      %v1002 = vrot.slane %v830, 1
      %v1003 = vsel %vm970, %v1001, %v1002
      %v1004 = vrot.slane %v831, 1
      %v1005 = vrot.slane %v832, 1
      %v1006 = vsel %vm970, %v1004, %v1005
      %v1007 = vrot.slane %v833, 1
      %v1008 = vrot.slane %v834, 1
      %v1009 = vsel %vm970, %v1007, %v1008
      %v1010 = vrot.slane %v835, 1
      %v1011 = vrot.slane %v836, 1
      %v1012 = vsel %vm970, %v1010, %v1011
      %v1013 = vrot.slane %v837, 1
      %v1014 = vrot.slane %v838, 1
      %v1015 = vsel %vm970, %v1013, %v1014
      %v1016 = vrot.slane %v839, 1
      %v1017 = vrot.slane %v840, 1
      %v1018 = vsel %vm970, %v1016, %v1017
      %v1035 = vsel %vm970, %v972, 0.0
      %v1036 = vsel %vm970, %v975, 0.0
      %v1037 = vsel %vm970, %v978, 0.0
      %v1038 = vsel %vm970, %v981, 0.0
      %v1039 = vsel %vm970, %v984, 0.0
      %v1040 = vsel %vm970, %v987, 0.0
      %v1041 = vsel %vm970, %v990, 0.0
      %v1042 = vsel %vm970, %v993, 0.0
      %v1043 = vsel %vm970, %v996, 0.0
      %v1044 = vsel %vm970, %v999, 0.0
      %v1045 = vsel %vm970, %v1002, 0.0
      %v1046 = vsel %vm970, %v1005, 0.0
      %v1047 = vsel %vm970, %v1008, 0.0
      %v1048 = vsel %vm970, %v1011, 0.0
      %v1049 = vsel %vm970, %v1014, 0.0
      %v1050 = vsel %vm970, %v1017, 0.0
      %1051 = vrot.lane.b32.xlu0 %v809, 4
      %v1052 = vpop.permute.xlu0 %1051
      %1053 = vrot.lane.b32.xlu0 %v810, 4
      %v1054 = vpop.permute.xlu0 %1053
      %1055 = vrot.lane.b32.xlu0 %v811, 4
      %v1056 = vpop.permute.xlu0 %1055
      %1057 = vrot.lane.b32.xlu0 %v812, 4
      %v1058 = vpop.permute.xlu0 %1057
      %1059 = vrot.lane.b32.xlu0 %v813, 4
      %v1060 = vpop.permute.xlu0 %1059
      %1061 = vrot.lane.b32.xlu0 %v814, 4
      %v1062 = vpop.permute.xlu0 %1061
      %1063 = vrot.lane.b32.xlu0 %v815, 4
      %v1064 = vpop.permute.xlu0 %1063
      %1065 = vrot.lane.b32.xlu0 %v816, 4
      %v1066 = vpop.permute.xlu0 %1065
      %1067 = vrot.lane.b32.xlu0 %v817, 4
      %v1068 = vpop.permute.xlu0 %1067
      %1069 = vrot.lane.b32.xlu0 %v818, 4
      %v1070 = vpop.permute.xlu0 %1069
      %1071 = vrot.lane.b32.xlu0 %v819, 4
      %v1072 = vpop.permute.xlu0 %1071
      %1073 = vrot.lane.b32.xlu0 %v820, 4
      %v1074 = vpop.permute.xlu0 %1073
      %1075 = vrot.lane.b32.xlu0 %v821, 4
      %v1076 = vpop.permute.xlu0 %1075
      %1077 = vrot.lane.b32.xlu0 %v822, 4
      %v1078 = vpop.permute.xlu0 %1077
      %1079 = vrot.lane.b32.xlu0 %v823, 4
      %v1080 = vpop.permute.xlu0 %1079
      %1081 = vrot.lane.b32.xlu0 %v824, 4
      %v1082 = vpop.permute.xlu0 %1081
      %1083 = vrot.lane.b32.xlu0 %v825, 4
      %v1084 = vpop.permute.xlu0 %1083
      %1085 = vrot.lane.b32.xlu0 %v826, 4
      %v1086 = vpop.permute.xlu0 %1085
      %1087 = vrot.lane.b32.xlu0 %v827, 4
      %v1088 = vpop.permute.xlu0 %1087
      %1089 = vrot.lane.b32.xlu0 %v828, 4
      %v1090 = vpop.permute.xlu0 %1089
      %1091 = vrot.lane.b32.xlu0 %v829, 4
      %v1092 = vpop.permute.xlu0 %1091
      %1093 = vrot.lane.b32.xlu0 %v830, 4
      %v1094 = vpop.permute.xlu0 %1093
      %1095 = vrot.lane.b32.xlu0 %v831, 4
      %v1096 = vpop.permute.xlu0 %1095
      %1097 = vrot.lane.b32.xlu0 %v832, 4
      %v1098 = vpop.permute.xlu0 %1097
      %1099 = vrot.lane.b32.xlu0 %v833, 4
      %v1100 = vpop.permute.xlu0 %1099
      %1101 = vrot.lane.b32.xlu0 %v834, 4
      %v1102 = vpop.permute.xlu0 %1101
      %1103 = vrot.lane.b32.xlu0 %v835, 4
      %v1104 = vpop.permute.xlu0 %1103
      %1105 = vrot.lane.b32.xlu0 %v836, 4
      %v1106 = vpop.permute.xlu0 %1105
      %1107 = vrot.lane.b32.xlu0 %v837, 4
      %v1108 = vpop.permute.xlu0 %1107
      %1109 = vrot.lane.b32.xlu0 %v838, 4
      %v1110 = vpop.permute.xlu0 %1109
      %1111 = vrot.lane.b32.xlu0 %v839, 4
      %v1112 = vpop.permute.xlu0 %1111
      %1113 = vrot.lane.b32.xlu0 %v840, 4
      %v1114 = vpop.permute.xlu0 %1113
      %1163 = vrot.lane.b32.xlu0 %v973, 8
      %v1164 = vpop.permute.xlu0 %1163
      %1165 = vrot.lane.b32.xlu0 %v1035, 8
      %v1166 = vpop.permute.xlu0 %1165
      %1167 = vrot.lane.b32.xlu0 %v976, 8
      %v1168 = vpop.permute.xlu0 %1167
      %1169 = vrot.lane.b32.xlu0 %v1036, 8
      %v1170 = vpop.permute.xlu0 %1169
      %1171 = vrot.lane.b32.xlu0 %v979, 8
      %v1172 = vpop.permute.xlu0 %1171
      %1173 = vrot.lane.b32.xlu0 %v1037, 8
      %v1174 = vpop.permute.xlu0 %1173
      %1175 = vrot.lane.b32.xlu0 %v982, 8
      %v1176 = vpop.permute.xlu0 %1175
      %1177 = vrot.lane.b32.xlu0 %v1038, 8
      %v1178 = vpop.permute.xlu0 %1177
      %1179 = vrot.lane.b32.xlu0 %v985, 8
      %v1180 = vpop.permute.xlu0 %1179
      %1181 = vrot.lane.b32.xlu0 %v1039, 8
      %v1182 = vpop.permute.xlu0 %1181
      %1183 = vrot.lane.b32.xlu0 %v988, 8
      %v1184 = vpop.permute.xlu0 %1183
      %1185 = vrot.lane.b32.xlu0 %v1040, 8
      %v1186 = vpop.permute.xlu0 %1185
      %1187 = vrot.lane.b32.xlu0 %v991, 8
      %v1188 = vpop.permute.xlu0 %1187
      %1189 = vrot.lane.b32.xlu0 %v1041, 8
      %v1190 = vpop.permute.xlu0 %1189
      %1191 = vrot.lane.b32.xlu0 %v994, 8
      %v1192 = vpop.permute.xlu0 %1191
      %1193 = vrot.lane.b32.xlu0 %v1042, 8
      %v1194 = vpop.permute.xlu0 %1193
      %1195 = vrot.lane.b32.xlu0 %v997, 8
      %v1196 = vpop.permute.xlu0 %1195
      %1197 = vrot.lane.b32.xlu0 %v1043, 8
      %v1198 = vpop.permute.xlu0 %1197
      %1199 = vrot.lane.b32.xlu0 %v1000, 8
      %v1200 = vpop.permute.xlu0 %1199
      %1201 = vrot.lane.b32.xlu0 %v1044, 8
      %v1202 = vpop.permute.xlu0 %1201
      %1203 = vrot.lane.b32.xlu0 %v1003, 8
      %v1204 = vpop.permute.xlu0 %1203
      %1205 = vrot.lane.b32.xlu0 %v1045, 8
      %v1206 = vpop.permute.xlu0 %1205
      %1207 = vrot.lane.b32.xlu0 %v1006, 8
      %v1208 = vpop.permute.xlu0 %1207
      %1209 = vrot.lane.b32.xlu0 %v1046, 8
      %v1210 = vpop.permute.xlu0 %1209
      %1211 = vrot.lane.b32.xlu0 %v1009, 8
      %v1212 = vpop.permute.xlu0 %1211
      %1213 = vrot.lane.b32.xlu0 %v1047, 8
      %v1214 = vpop.permute.xlu0 %1213
      %1215 = vrot.lane.b32.xlu0 %v1012, 8
      %v1216 = vpop.permute.xlu0 %1215
      %1217 = vrot.lane.b32.xlu0 %v1048, 8
      %v1218 = vpop.permute.xlu0 %1217
      %1219 = vrot.lane.b32.xlu0 %v1015, 8
      %v1220 = vpop.permute.xlu0 %1219
      %1221 = vrot.lane.b32.xlu0 %v1049, 8
      %v1222 = vpop.permute.xlu0 %1221
      %1223 = vrot.lane.b32.xlu0 %v1018, 8
      %v1224 = vpop.permute.xlu0 %1223
      %1225 = vrot.lane.b32.xlu0 %v1050, 8
      %v1226 = vpop.permute.xlu0 %1225
      %v1259 = vsel %vm483, %v954, %v1052
      %v1260 = vsel %vm483, %v876, %v1054
      %v1261 = vsel %vm483, %v955, %v1056
      %v1262 = vsel %vm483, %v879, %v1058
      %v1263 = vsel %vm483, %v956, %v1060
      %v1264 = vsel %vm483, %v882, %v1062
      %v1265 = vsel %vm483, %v957, %v1064
      %v1266 = vsel %vm483, %v885, %v1066
      %v1267 = vsel %vm483, %v958, %v1068
      %v1268 = vsel %vm483, %v888, %v1070
      %v1269 = vsel %vm483, %v959, %v1072
      %v1270 = vsel %vm483, %v891, %v1074
      %v1271 = vsel %vm483, %v960, %v1076
      %v1272 = vsel %vm483, %v894, %v1078
      %v1273 = vsel %vm483, %v961, %v1080
      %v1274 = vsel %vm483, %v897, %v1082
      %v1275 = vsel %vm483, %v962, %v1084
      %v1276 = vsel %vm483, %v900, %v1086
      %v1277 = vsel %vm483, %v963, %v1088
      %v1278 = vsel %vm483, %v903, %v1090
      %v1279 = vsel %vm483, %v964, %v1092
      %v1280 = vsel %vm483, %v906, %v1094
      %v1281 = vsel %vm483, %v965, %v1096
      %v1282 = vsel %vm483, %v909, %v1098
      %v1283 = vsel %vm483, %v966, %v1100
      %v1284 = vsel %vm483, %v912, %v1102
      %v1285 = vsel %vm483, %v967, %v1104
      %v1286 = vsel %vm483, %v915, %v1106
      %v1287 = vsel %vm483, %v968, %v1108
      %v1288 = vsel %vm483, %v918, %v1110
      %v1289 = vsel %vm483, %v969, %v1112
      %v1290 = vsel %vm483, %v921, %v1114
      %vm1291 = vcmask 64512
      %v1292 = vsel %vm1291, %v1259, %v1164
      %v1293 = vsel %vm1291, %v1260, %v1166
      %v1294 = vsel %vm1291, %v1261, %v1168
      %v1295 = vsel %vm1291, %v1262, %v1170
      %v1296 = vsel %vm1291, %v1263, %v1172
      %v1297 = vsel %vm1291, %v1264, %v1174
      %v1298 = vsel %vm1291, %v1265, %v1176
      %v1299 = vsel %vm1291, %v1266, %v1178
      %v1300 = vsel %vm1291, %v1267, %v1180
      %v1301 = vsel %vm1291, %v1268, %v1182
      %v1302 = vsel %vm1291, %v1269, %v1184
      %v1303 = vsel %vm1291, %v1270, %v1186
      %v1304 = vsel %vm1291, %v1271, %v1188
      %v1305 = vsel %vm1291, %v1272, %v1190
      %v1306 = vsel %vm1291, %v1273, %v1192
      %v1307 = vsel %vm1291, %v1274, %v1194
      %v1308 = vsel %vm1291, %v1275, %v1196
      %v1309 = vsel %vm1291, %v1276, %v1198
      %v1310 = vsel %vm1291, %v1277, %v1200
      %v1311 = vsel %vm1291, %v1278, %v1202
      %v1312 = vsel %vm1291, %v1279, %v1204
      %v1313 = vsel %vm1291, %v1280, %v1206
      %v1314 = vsel %vm1291, %v1281, %v1208
      %v1315 = vsel %vm1291, %v1282, %v1210
      %v1316 = vsel %vm1291, %v1283, %v1212
      %v1317 = vsel %vm1291, %v1284, %v1214
      %v1318 = vsel %vm1291, %v1285, %v1216
      %v1319 = vsel %vm1291, %v1286, %v1218
      %v1320 = vsel %vm1291, %v1287, %v1220
      %v1321 = vsel %vm1291, %v1288, %v1222
      %v1322 = vsel %vm1291, %v1289, %v1224
      %v1323 = vsel %vm1291, %v1290, %v1226
      %v1324 = vld [vmem:[%s5] sm:$0xff]
      %v1325 = vld [vmem:[%s5 + $0x8] sm:$0xf]
      %vm1326 = vcmask 97280
      %v1328 = vsel %vm1326, %v1292, 0
      %v1331 = vsel %vm1326, %v1293, 0
      %v1334 = vsel %vm1326, %v1294, 0
      %v1337 = vsel %vm1326, %v1295, 0
      %v1340 = vsel %vm1326, %v1296, 0
      %v1343 = vsel %vm1326, %v1297, 0
      %v1346 = vsel %vm1326, %v1298, 0
      %v1349 = vsel %vm1326, %v1299, 0
      %v1352 = vsel %vm1326, %v1300, 0
      %v1355 = vsel %vm1326, %v1301, 0
      %v1358 = vsel %vm1326, %v1302, 0
      %v1361 = vsel %vm1326, %v1303, 0
      %v1364 = vsel %vm1326, %v1304, 0
      %v1367 = vsel %vm1326, %v1305, 0
      %v1370 = vsel %vm1326, %v1306, 0
      %v1373 = vsel %vm1326, %v1307, 0
      %v1376 = vsel %vm1326, %v1308, 0
      %v1379 = vsel %vm1326, %v1309, 0
      %v1382 = vsel %vm1326, %v1310, 0
      %v1385 = vsel %vm1326, %v1311, 0
      %v1388 = vsel %vm1326, %v1312, 0
      %v1391 = vsel %vm1326, %v1313, 0
      %v1394 = vsel %vm1326, %v1314, 0
      %v1397 = vsel %vm1326, %v1315, 0
      %v1400 = vsel %vm1326, %v1316, 0
      %v1403 = vsel %vm1326, %v1317, 0
      %v1406 = vsel %vm1326, %v1318, 0
      %v1409 = vsel %vm1326, %v1319, 0
      %v1412 = vsel %vm1326, %v1320, 0
      %v1415 = vsel %vm1326, %v1321, 0
      %v1418 = vsel %vm1326, %v1322, 0
      %v1421 = vsel %vm1326, %v1323, 0
      %v1424 = vsel %vm580, %v1325, 0
      %1426 = vmatprep.subr.mxu0 0.0
      %1427 = vmatpush1.msra.mxu0 %v1324
      %1428 = vmatprep.subr.mxu0 0.0
      %1429 = vmatpush1.msra.mxu0 %v1424
      %1430 = vmatprep.subr.mxu0 0.0
      %1431 = vmatpush1.msra.mxu0 0.0
      %1432 = vmatprep.subr.mxu0 0.0
      %1433 = vmatpush1.msra.mxu0 0.0
      %1434 = vmatprep.subr.mxu0 0.0
      %1435 = vmatpush1.msra.mxu0 0.0
      %1436 = vmatprep.subr.mxu0 0.0
      %1437 = vmatpush1.msra.mxu0 0.0
      %1438 = vmatprep.subr.mxu0 0.0
      %1439 = vmatpush1.msra.mxu0 0.0
      %1440 = vmatprep.subr.mxu0 0.0
      %1441 = vmatpush1.msra.mxu0 0.0
      %1442 = vmatprep.subr.mxu0 0.0
      %1443 = vmatpush1.msra.mxu0 0.0
      %1444 = vmatprep.subr.mxu0 0.0
      %1445 = vmatpush1.msra.mxu0 0.0
      %1446 = vmatprep.subr.mxu0 0.0
      %1447 = vmatpush1.msra.mxu0 0.0
      %1448 = vmatprep.subr.mxu0 0.0
      %1449 = vmatpush1.msra.mxu0 0.0
      %1450 = vmatprep.subr.mxu0 0.0
      %1451 = vmatpush1.msra.mxu0 0.0
      %1452 = vmatprep.subr.mxu0 0.0
      %1453 = vmatpush1.msra.mxu0 0.0
      %1454 = vmatprep.subr.mxu0 0.0
      %1455 = vmatpush1.msra.mxu0 0.0
      %1456 = vmatprep.subr.mxu0 0.0
      %1457 = vmatpush1.msra.mxu0 0.0
      %1458 = vmatprep.subr.mxu0 0.0
      %1459 = vmatpush1.msra.mxu0 0.0
      %1460 = vmatprep.subr.mxu0 0.0
      %1461 = vmatpush1.msra.mxu0 0.0
      %1462 = vmatprep.subr.mxu0 0.0
      %1463 = vmatpush1.msra.mxu0 0.0
      %1464 = vmatprep.subr.mxu0 0.0
      %1465 = vmatpush1.msra.mxu0 0.0
      %1466 = vmatprep.subr.mxu0 0.0
      %1467 = vmatpush1.msra.mxu0 0.0
      %1468 = vmatprep.subr.mxu0 0.0
      %1469 = vmatpush1.msra.mxu0 0.0
      %1470 = vmatprep.subr.mxu0 0.0
      %1471 = vmatpush1.msra.mxu0 0.0
      %1472 = vmatprep.subr.mxu0 0.0
      %1473 = vmatpush1.msra.mxu0 0.0
      %1474 = vmatprep.subr.mxu0 0.0
      %1475 = vmatpush1.msra.mxu0 0.0
      %1476 = vmatprep.subr.mxu0 0.0
      %1477 = vmatpush1.msra.mxu0 0.0
      %1478 = vmatprep.subr.mxu0 0.0
      %1479 = vmatpush1.msra.mxu0 0.0
      %1480 = vmatprep.subr.mxu0 0.0
      %1481 = vmatpush1.msra.mxu0 0.0
      %1482 = vmatprep.subr.mxu0 0.0
      %1483 = vmatpush1.msra.mxu0 0.0
      %1484 = vmatprep.subr.mxu0 0.0
      %1485 = vmatpush1.msra.mxu0 0.0
      %1486 = vmatprep.subr.mxu0 0.0
      %1487 = vmatpush1.msra.mxu0 0.0
      %1488 = vmatprep.subr.mxu0 0.0
      %1489 = vmatpush1.msra.mxu0 0.0
      %1490 = vmatprep.mubr.f32.mxu0 0.0
      %1491 = vmatmul.mubr.f32.gmra.mrb[0].mxu0 %v1328
      %v1492 = vpop.f32.mrb[0].mxu0
      %v1493 = vadd.f32 0.0, %v1492
      %v1494 = vpop.f32.mrb[0].mxu0
      %1495 = vmatprep.mubr.f32.mxu0 0.0
      %1496 = vmatmul.mubr.f32.gmra.mrb[0].mxu0 %v1331
      %v1497 = vpop.f32.mrb[0].mxu0
      %v1498 = vadd.f32 0.0, %v1497
      %v1499 = vpop.f32.mrb[0].mxu0
      %1500 = vmatprep.mubr.f32.mxu0 0.0
      %1501 = vmatmul.mubr.f32.gmra.mrb[0].mxu0 %v1334
      %v1502 = vpop.f32.mrb[0].mxu0
      %v1503 = vadd.f32 0.0, %v1502
      %v1504 = vpop.f32.mrb[0].mxu0
      %1505 = vmatprep.mubr.f32.mxu0 0.0
      %1506 = vmatmul.mubr.f32.gmra.mrb[0].mxu0 %v1337
      %v1507 = vpop.f32.mrb[0].mxu0
      %v1508 = vadd.f32 0.0, %v1507
      %v1509 = vpop.f32.mrb[0].mxu0
      %1510 = vmatprep.mubr.f32.mxu0 0.0
      %1511 = vmatmul.mubr.f32.gmra.mrb[0].mxu0 %v1340
      %v1512 = vpop.f32.mrb[0].mxu0
      %v1513 = vadd.f32 0.0, %v1512
      %v1514 = vpop.f32.mrb[0].mxu0
      %1515 = vmatprep.mubr.f32.mxu0 0.0
      %1516 = vmatmul.mubr.f32.gmra.mrb[0].mxu0 %v1343
      %v1517 = vpop.f32.mrb[0].mxu0
      %v1518 = vadd.f32 0.0, %v1517
      %v1519 = vpop.f32.mrb[0].mxu0
      %1520 = vmatprep.mubr.f32.mxu0 0.0
      %1521 = vmatmul.mubr.f32.gmra.mrb[0].mxu0 %v1346
      %v1522 = vpop.f32.mrb[0].mxu0
      %v1523 = vadd.f32 0.0, %v1522
      %v1524 = vpop.f32.mrb[0].mxu0
      %1525 = vmatprep.mubr.f32.mxu0 0.0
      %1526 = vmatmul.mubr.f32.gmra.mrb[0].mxu0 %v1349
      %v1527 = vpop.f32.mrb[0].mxu0
      %v1528 = vadd.f32 0.0, %v1527
      %v1529 = vpop.f32.mrb[0].mxu0
      %1530 = vmatprep.mubr.f32.mxu0 0.0
      %1531 = vmatmul.mubr.f32.gmra.mrb[0].mxu0 %v1352
      %v1532 = vpop.f32.mrb[0].mxu0
      %v1533 = vadd.f32 0.0, %v1532
      %v1534 = vpop.f32.mrb[0].mxu0
      %1535 = vmatprep.mubr.f32.mxu0 0.0
      %1536 = vmatmul.mubr.f32.gmra.mrb[0].mxu0 %v1355
      %v1537 = vpop.f32.mrb[0].mxu0
      %v1538 = vadd.f32 0.0, %v1537
      %v1539 = vpop.f32.mrb[0].mxu0
      %1540 = vmatprep.mubr.f32.mxu0 0.0
      %1541 = vmatmul.mubr.f32.gmra.mrb[0].mxu0 %v1358
      %v1542 = vpop.f32.mrb[0].mxu0
      %v1543 = vadd.f32 0.0, %v1542
      %v1544 = vpop.f32.mrb[0].mxu0
      %1545 = vmatprep.mubr.f32.mxu0 0.0
      %1546 = vmatmul.mubr.f32.gmra.mrb[0].mxu0 %v1361
      %v1547 = vpop.f32.mrb[0].mxu0
      %v1548 = vadd.f32 0.0, %v1547
      %v1549 = vpop.f32.mrb[0].mxu0
      %1550 = vmatprep.mubr.f32.mxu0 0.0
      %1551 = vmatmul.mubr.f32.gmra.mrb[0].mxu0 %v1364
      %v1552 = vpop.f32.mrb[0].mxu0
      %v1553 = vadd.f32 0.0, %v1552
      %v1554 = vpop.f32.mrb[0].mxu0
      %1555 = vmatprep.mubr.f32.mxu0 0.0
      %1556 = vmatmul.mubr.f32.gmra.mrb[0].mxu0 %v1367
      %v1557 = vpop.f32.mrb[0].mxu0
      %v1558 = vadd.f32 0.0, %v1557
      %v1559 = vpop.f32.mrb[0].mxu0
      %1560 = vmatprep.mubr.f32.mxu0 0.0
      %1561 = vmatmul.mubr.f32.gmra.mrb[0].mxu0 %v1370
      %v1562 = vpop.f32.mrb[0].mxu0
      %v1563 = vadd.f32 0.0, %v1562
      %v1564 = vpop.f32.mrb[0].mxu0
      %1565 = vmatprep.mubr.f32.mxu0 0.0
      %1566 = vmatmul.mubr.f32.gmra.mrb[0].mxu0 %v1373
      %v1567 = vpop.f32.mrb[0].mxu0
      %v1568 = vadd.f32 0.0, %v1567
      %v1569 = vpop.f32.mrb[0].mxu0
      %1570 = vmatprep.mubr.f32.mxu0 0.0
      %1571 = vmatmul.mubr.f32.gmra.mrb[0].mxu0 %v1376
      %v1572 = vpop.f32.mrb[0].mxu0
      %v1573 = vadd.f32 0.0, %v1572
      %v1574 = vpop.f32.mrb[0].mxu0
      %1575 = vmatprep.mubr.f32.mxu0 0.0
      %1576 = vmatmul.mubr.f32.gmra.mrb[0].mxu0 %v1379
      %v1577 = vpop.f32.mrb[0].mxu0
      %v1578 = vadd.f32 0.0, %v1577
      %v1579 = vpop.f32.mrb[0].mxu0
      %1580 = vmatprep.mubr.f32.mxu0 0.0
      %1581 = vmatmul.mubr.f32.gmra.mrb[0].mxu0 %v1382
      %v1582 = vpop.f32.mrb[0].mxu0
      %v1583 = vadd.f32 0.0, %v1582
      %v1584 = vpop.f32.mrb[0].mxu0
      %1585 = vmatprep.mubr.f32.mxu0 0.0
      %1586 = vmatmul.mubr.f32.gmra.mrb[0].mxu0 %v1385
      %v1587 = vpop.f32.mrb[0].mxu0
      %v1588 = vadd.f32 0.0, %v1587
      %v1589 = vpop.f32.mrb[0].mxu0
      %1590 = vmatprep.mubr.f32.mxu0 0.0
      %1591 = vmatmul.mubr.f32.gmra.mrb[0].mxu0 %v1388
      %v1592 = vpop.f32.mrb[0].mxu0
      %v1593 = vadd.f32 0.0, %v1592
      %v1594 = vpop.f32.mrb[0].mxu0
      %1595 = vmatprep.mubr.f32.mxu0 0.0
      %1596 = vmatmul.mubr.f32.gmra.mrb[0].mxu0 %v1391
      %v1597 = vpop.f32.mrb[0].mxu0
      %v1598 = vadd.f32 0.0, %v1597
      %v1599 = vpop.f32.mrb[0].mxu0
      %1600 = vmatprep.mubr.f32.mxu0 0.0
      %1601 = vmatmul.mubr.f32.gmra.mrb[0].mxu0 %v1394
      %v1602 = vpop.f32.mrb[0].mxu0
      %v1603 = vadd.f32 0.0, %v1602
      %v1604 = vpop.f32.mrb[0].mxu0
      %1605 = vmatprep.mubr.f32.mxu0 0.0
      %1606 = vmatmul.mubr.f32.gmra.mrb[0].mxu0 %v1397
      %v1607 = vpop.f32.mrb[0].mxu0
      %v1608 = vadd.f32 0.0, %v1607
      %v1609 = vpop.f32.mrb[0].mxu0
      %1610 = vmatprep.mubr.f32.mxu0 0.0
      %1611 = vmatmul.mubr.f32.gmra.mrb[0].mxu0 %v1400
      %v1612 = vpop.f32.mrb[0].mxu0
      %v1613 = vadd.f32 0.0, %v1612
      %v1614 = vpop.f32.mrb[0].mxu0
      %1615 = vmatprep.mubr.f32.mxu0 0.0
      %1616 = vmatmul.mubr.f32.gmra.mrb[0].mxu0 %v1403
      %v1617 = vpop.f32.mrb[0].mxu0
      %v1618 = vadd.f32 0.0, %v1617
      %v1619 = vpop.f32.mrb[0].mxu0
      %1620 = vmatprep.mubr.f32.mxu0 0.0
      %1621 = vmatmul.mubr.f32.gmra.mrb[0].mxu0 %v1406
      %v1622 = vpop.f32.mrb[0].mxu0
      %v1623 = vadd.f32 0.0, %v1622
      %v1624 = vpop.f32.mrb[0].mxu0
      %1625 = vmatprep.mubr.f32.mxu0 0.0
      %1626 = vmatmul.mubr.f32.gmra.mrb[0].mxu0 %v1409
      %v1627 = vpop.f32.mrb[0].mxu0
      %v1628 = vadd.f32 0.0, %v1627
      %v1629 = vpop.f32.mrb[0].mxu0
      %1630 = vmatprep.mubr.f32.mxu0 0.0
      %1631 = vmatmul.mubr.f32.gmra.mrb[0].mxu0 %v1412
      %v1632 = vpop.f32.mrb[0].mxu0
      %v1633 = vadd.f32 0.0, %v1632
      %v1634 = vpop.f32.mrb[0].mxu0
      %1635 = vmatprep.mubr.f32.mxu0 0.0
      %1636 = vmatmul.mubr.f32.gmra.mrb[0].mxu0 %v1415
      %v1637 = vpop.f32.mrb[0].mxu0
      %v1638 = vadd.f32 0.0, %v1637
      %v1639 = vpop.f32.mrb[0].mxu0
      %1640 = vmatprep.mubr.f32.mxu0 0.0
      %1641 = vmatmul.mubr.f32.gmra.mrb[0].mxu0 %v1418
      %v1642 = vpop.f32.mrb[0].mxu0
      %v1643 = vpop.f32.mrb[0].mxu0
      %1644 = vmatprep.mubr.f32.mxu0 0.0
      %1645 = vmatmul.mubr.f32.gmra.mrb[0].mxu0 %v1421
      %v1646 = vpop.f32.mrb[0].mxu0
      %v1647 = vpop.f32.mrb[0].mxu0
      %1648 = vdwg.mxu0
      %v1649 = vld [vmem:[%s5 + $0xc] sm:$0xff]
      %v1650 = vld [vmem:[%s5 + $0x14] sm:$0xf]
      %v1652 = vsel %vm580, %v1650, 0
      %1654 = vmatprep.subr.mxu0 0.0
      %1655 = vmatpush1.msra.mxu0 %v1649
      %1656 = vmatprep.subr.mxu0 0.0
      %1657 = vmatpush1.msra.mxu0 %v1652
      %1658 = vmatprep.subr.mxu0 0.0
      %1659 = vmatpush1.msra.mxu0 0.0
      %1660 = vmatprep.subr.mxu0 0.0
      %1661 = vmatpush1.msra.mxu0 0.0
      %1662 = vmatprep.subr.mxu0 0.0
      %1663 = vmatpush1.msra.mxu0 0.0
      %1664 = vmatprep.subr.mxu0 0.0
      %1665 = vmatpush1.msra.mxu0 0.0
      %1666 = vmatprep.subr.mxu0 0.0
      %1667 = vmatpush1.msra.mxu0 0.0
      %1668 = vmatprep.subr.mxu0 0.0
      %1669 = vmatpush1.msra.mxu0 0.0
      %1670 = vmatprep.subr.mxu0 0.0
      %1671 = vmatpush1.msra.mxu0 0.0
      %1672 = vmatprep.subr.mxu0 0.0
      %1673 = vmatpush1.msra.mxu0 0.0
      %1674 = vmatprep.subr.mxu0 0.0
      %1675 = vmatpush1.msra.mxu0 0.0
      %1676 = vmatprep.subr.mxu0 0.0
      %1677 = vmatpush1.msra.mxu0 0.0
      %1678 = vmatprep.subr.mxu0 0.0
      %1679 = vmatpush1.msra.mxu0 0.0
      %1680 = vmatprep.subr.mxu0 0.0
      %1681 = vmatpush1.msra.mxu0 0.0
      %1682 = vmatprep.subr.mxu0 0.0
      %1683 = vmatpush1.msra.mxu0 0.0
      %1684 = vmatprep.subr.mxu0 0.0
      %1685 = vmatpush1.msra.mxu0 0.0
      %1686 = vmatprep.subr.mxu0 0.0
      %1687 = vmatpush1.msra.mxu0 0.0
      %1688 = vmatprep.subr.mxu0 0.0
      %1689 = vmatpush1.msra.mxu0 0.0
      %1690 = vmatprep.subr.mxu0 0.0
      %1691 = vmatpush1.msra.mxu0 0.0
      %1692 = vmatprep.subr.mxu0 0.0
      %1693 = vmatpush1.msra.mxu0 0.0
      %1694 = vmatprep.subr.mxu0 0.0
      %1695 = vmatpush1.msra.mxu0 0.0
      %1696 = vmatprep.subr.mxu0 0.0
      %1697 = vmatpush1.msra.mxu0 0.0
      %1698 = vmatprep.subr.mxu0 0.0
      %1699 = vmatpush1.msra.mxu0 0.0
      %1700 = vmatprep.subr.mxu0 0.0
      %1701 = vmatpush1.msra.mxu0 0.0
      %1702 = vmatprep.subr.mxu0 0.0
      %1703 = vmatpush1.msra.mxu0 0.0
      %1704 = vmatprep.subr.mxu0 0.0
      %1705 = vmatpush1.msra.mxu0 0.0
      %1706 = vmatprep.subr.mxu0 0.0
      %1707 = vmatpush1.msra.mxu0 0.0
      %1708 = vmatprep.subr.mxu0 0.0
      %1709 = vmatpush1.msra.mxu0 0.0
      %1710 = vmatprep.subr.mxu0 0.0
      %1711 = vmatpush1.msra.mxu0 0.0
      %1712 = vmatprep.subr.mxu0 0.0
      %1713 = vmatpush1.msra.mxu0 0.0
      %1714 = vmatprep.subr.mxu0 0.0
      %1715 = vmatpush1.msra.mxu0 0.0
      %1716 = vmatprep.subr.mxu0 0.0
      %1717 = vmatpush1.msra.mxu0 0.0
      %1718 = vmatprep.mubr.f32.mxu0 0.0
      %1719 = vmatmul.mubr.f32.gmra.mrb[0].mxu0 %v1328
      %v1720 = vpop.f32.mrb[0].mxu0
      %v1721 = vadd.f32 0.0, %v1720
      %v1722 = vpop.f32.mrb[0].mxu0
      %1723 = vmatprep.mubr.f32.mxu0 0.0
      %1724 = vmatmul.mubr.f32.gmra.mrb[0].mxu0 %v1331
      %v1725 = vpop.f32.mrb[0].mxu0
      %v1726 = vadd.f32 0.0, %v1725
      %v1727 = vpop.f32.mrb[0].mxu0
      %1728 = vmatprep.mubr.f32.mxu0 0.0
      %1729 = vmatmul.mubr.f32.gmra.mrb[0].mxu0 %v1334
      %v1730 = vpop.f32.mrb[0].mxu0
      %v1731 = vadd.f32 0.0, %v1730
      %v1732 = vpop.f32.mrb[0].mxu0
      %1733 = vmatprep.mubr.f32.mxu0 0.0
      %1734 = vmatmul.mubr.f32.gmra.mrb[0].mxu0 %v1337
      %v1735 = vpop.f32.mrb[0].mxu0
      %v1736 = vadd.f32 0.0, %v1735
      %v1737 = vpop.f32.mrb[0].mxu0
      %1738 = vmatprep.mubr.f32.mxu0 0.0
      %1739 = vmatmul.mubr.f32.gmra.mrb[0].mxu0 %v1340
      %v1740 = vpop.f32.mrb[0].mxu0
      %v1741 = vadd.f32 0.0, %v1740
      %v1742 = vpop.f32.mrb[0].mxu0
      %1743 = vmatprep.mubr.f32.mxu0 0.0
      %1744 = vmatmul.mubr.f32.gmra.mrb[0].mxu0 %v1343
      %v1745 = vpop.f32.mrb[0].mxu0
      %v1746 = vadd.f32 0.0, %v1745
      %v1747 = vpop.f32.mrb[0].mxu0
      %1748 = vmatprep.mubr.f32.mxu0 0.0
      %1749 = vmatmul.mubr.f32.gmra.mrb[0].mxu0 %v1346
      %v1750 = vpop.f32.mrb[0].mxu0
      %v1751 = vadd.f32 0.0, %v1750
      %v1752 = vpop.f32.mrb[0].mxu0
      %1753 = vmatprep.mubr.f32.mxu0 0.0
      %1754 = vmatmul.mubr.f32.gmra.mrb[0].mxu0 %v1349
      %v1755 = vpop.f32.mrb[0].mxu0
      %v1756 = vadd.f32 0.0, %v1755
      %v1757 = vpop.f32.mrb[0].mxu0
      %1758 = vmatprep.mubr.f32.mxu0 0.0
      %1759 = vmatmul.mubr.f32.gmra.mrb[0].mxu0 %v1352
      %v1760 = vpop.f32.mrb[0].mxu0
      %v1761 = vadd.f32 0.0, %v1760
      %v1762 = vpop.f32.mrb[0].mxu0
      %1763 = vmatprep.mubr.f32.mxu0 0.0
      %1764 = vmatmul.mubr.f32.gmra.mrb[0].mxu0 %v1355
      %v1765 = vpop.f32.mrb[0].mxu0
      %v1766 = vadd.f32 0.0, %v1765
      %v1767 = vpop.f32.mrb[0].mxu0
      %1768 = vmatprep.mubr.f32.mxu0 0.0
      %1769 = vmatmul.mubr.f32.gmra.mrb[0].mxu0 %v1358
      %v1770 = vpop.f32.mrb[0].mxu0
      %v1771 = vadd.f32 0.0, %v1770
      %v1772 = vpop.f32.mrb[0].mxu0
      %1773 = vmatprep.mubr.f32.mxu0 0.0
      %1774 = vmatmul.mubr.f32.gmra.mrb[0].mxu0 %v1361
      %v1775 = vpop.f32.mrb[0].mxu0
      %v1776 = vadd.f32 0.0, %v1775
      %v1777 = vpop.f32.mrb[0].mxu0
      %1778 = vmatprep.mubr.f32.mxu0 0.0
      %1779 = vmatmul.mubr.f32.gmra.mrb[0].mxu0 %v1364
      %v1780 = vpop.f32.mrb[0].mxu0
      %v1781 = vadd.f32 0.0, %v1780
      %v1782 = vpop.f32.mrb[0].mxu0
      %1783 = vmatprep.mubr.f32.mxu0 0.0
      %1784 = vmatmul.mubr.f32.gmra.mrb[0].mxu0 %v1367
      %v1785 = vpop.f32.mrb[0].mxu0
      %v1786 = vadd.f32 0.0, %v1785
      %v1787 = vpop.f32.mrb[0].mxu0
      %1788 = vmatprep.mubr.f32.mxu0 0.0
      %1789 = vmatmul.mubr.f32.gmra.mrb[0].mxu0 %v1370
      %v1790 = vpop.f32.mrb[0].mxu0
      %v1791 = vadd.f32 0.0, %v1790
      %v1792 = vpop.f32.mrb[0].mxu0
      %1793 = vmatprep.mubr.f32.mxu0 0.0
      %1794 = vmatmul.mubr.f32.gmra.mrb[0].mxu0 %v1373
      %v1795 = vpop.f32.mrb[0].mxu0
      %v1796 = vadd.f32 0.0, %v1795
      %v1797 = vpop.f32.mrb[0].mxu0
      %1798 = vmatprep.mubr.f32.mxu0 0.0
      %1799 = vmatmul.mubr.f32.gmra.mrb[0].mxu0 %v1376
      %v1800 = vpop.f32.mrb[0].mxu0
      %v1801 = vadd.f32 0.0, %v1800
      %v1802 = vpop.f32.mrb[0].mxu0
      %1803 = vmatprep.mubr.f32.mxu0 0.0
      %1804 = vmatmul.mubr.f32.gmra.mrb[0].mxu0 %v1379
      %v1805 = vpop.f32.mrb[0].mxu0
      %v1806 = vadd.f32 0.0, %v1805
      %v1807 = vpop.f32.mrb[0].mxu0
      %1808 = vmatprep.mubr.f32.mxu0 0.0
      %1809 = vmatmul.mubr.f32.gmra.mrb[0].mxu0 %v1382
      %v1810 = vpop.f32.mrb[0].mxu0
      %v1811 = vadd.f32 0.0, %v1810
      %v1812 = vpop.f32.mrb[0].mxu0
      %1813 = vmatprep.mubr.f32.mxu0 0.0
      %1814 = vmatmul.mubr.f32.gmra.mrb[0].mxu0 %v1385
      %v1815 = vpop.f32.mrb[0].mxu0
      %v1816 = vadd.f32 0.0, %v1815
      %v1817 = vpop.f32.mrb[0].mxu0
      %1818 = vmatprep.mubr.f32.mxu0 0.0
      %1819 = vmatmul.mubr.f32.gmra.mrb[0].mxu0 %v1388
      %v1820 = vpop.f32.mrb[0].mxu0
      %v1821 = vadd.f32 0.0, %v1820
      %v1822 = vpop.f32.mrb[0].mxu0
      %1823 = vmatprep.mubr.f32.mxu0 0.0
      %1824 = vmatmul.mubr.f32.gmra.mrb[0].mxu0 %v1391
      %v1825 = vpop.f32.mrb[0].mxu0
      %v1826 = vadd.f32 0.0, %v1825
      %v1827 = vpop.f32.mrb[0].mxu0
      %1828 = vmatprep.mubr.f32.mxu0 0.0
      %1829 = vmatmul.mubr.f32.gmra.mrb[0].mxu0 %v1394
      %v1830 = vpop.f32.mrb[0].mxu0
      %v1831 = vadd.f32 0.0, %v1830
      %v1832 = vpop.f32.mrb[0].mxu0
      %1833 = vmatprep.mubr.f32.mxu0 0.0
      %1834 = vmatmul.mubr.f32.gmra.mrb[0].mxu0 %v1397
      %v1835 = vpop.f32.mrb[0].mxu0
      %v1836 = vadd.f32 0.0, %v1835
      %v1837 = vpop.f32.mrb[0].mxu0
      %1838 = vmatprep.mubr.f32.mxu0 0.0
      %1839 = vmatmul.mubr.f32.gmra.mrb[0].mxu0 %v1400
      %v1840 = vpop.f32.mrb[0].mxu0
      %v1841 = vadd.f32 0.0, %v1840
      %v1842 = vpop.f32.mrb[0].mxu0
      %1843 = vmatprep.mubr.f32.mxu0 0.0
      %1844 = vmatmul.mubr.f32.gmra.mrb[0].mxu0 %v1403
      %v1845 = vpop.f32.mrb[0].mxu0
      %v1846 = vadd.f32 0.0, %v1845
      %v1847 = vpop.f32.mrb[0].mxu0
      %1848 = vmatprep.mubr.f32.mxu0 0.0
      %1849 = vmatmul.mubr.f32.gmra.mrb[0].mxu0 %v1406
      %v1850 = vpop.f32.mrb[0].mxu0
      %v1851 = vadd.f32 0.0, %v1850
      %v1852 = vpop.f32.mrb[0].mxu0
      %1853 = vmatprep.mubr.f32.mxu0 0.0
      %1854 = vmatmul.mubr.f32.gmra.mrb[0].mxu0 %v1409
      %v1855 = vpop.f32.mrb[0].mxu0
      %v1856 = vadd.f32 0.0, %v1855
      %v1857 = vpop.f32.mrb[0].mxu0
      %1858 = vmatprep.mubr.f32.mxu0 0.0
      %1859 = vmatmul.mubr.f32.gmra.mrb[0].mxu0 %v1412
      %v1860 = vpop.f32.mrb[0].mxu0
      %v1861 = vadd.f32 0.0, %v1860
      %v1862 = vpop.f32.mrb[0].mxu0
      %1863 = vmatprep.mubr.f32.mxu0 0.0
      %1864 = vmatmul.mubr.f32.gmra.mrb[0].mxu0 %v1415
      %v1865 = vpop.f32.mrb[0].mxu0
      %v1866 = vadd.f32 0.0, %v1865
      %v1867 = vpop.f32.mrb[0].mxu0
      %1868 = vmatprep.mubr.f32.mxu0 0.0
      %1869 = vmatmul.mubr.f32.gmra.mrb[0].mxu0 %v1418
      %v1870 = vpop.f32.mrb[0].mxu0
      %v1871 = vadd.f32 0.0, %v1870
      %v1872 = vpop.f32.mrb[0].mxu0
      %1873 = vmatprep.mubr.f32.mxu0 0.0
      %1874 = vmatmul.mubr.f32.gmra.mrb[0].mxu0 %v1421
      %v1875 = vpop.f32.mrb[0].mxu0
      %v1876 = vadd.f32 0.0, %v1875
      %v1877 = vpop.f32.mrb[0].mxu0
      %1878 = vdwg.mxu0
      %v1879 = vadd.f32 %v1721, 0.0
      %v1880 = vadd.f32 %v1726, 0.0
      %v1881 = vadd.f32 %v1493, %v1731
      %v1882 = vadd.f32 %v1498, %v1736
      %v1883 = vadd.f32 %v1503, %v1741
      %v1884 = vadd.f32 %v1508, %v1746
      %v1885 = vadd.f32 %v1513, %v1751
      %v1886 = vadd.f32 %v1518, %v1756
      %v1887 = vadd.f32 %v1523, %v1761
      %v1888 = vadd.f32 %v1528, %v1766
      %v1889 = vadd.f32 %v1533, %v1771
      %v1890 = vadd.f32 %v1538, %v1776
      %v1891 = vadd.f32 %v1543, %v1781
      %v1892 = vadd.f32 %v1548, %v1786
      %v1893 = vadd.f32 %v1553, %v1791
      %v1894 = vadd.f32 %v1558, %v1796
      %v1895 = vadd.f32 %v1563, %v1801
      %v1896 = vadd.f32 %v1568, %v1806
      %v1897 = vadd.f32 %v1573, %v1811
      %v1898 = vadd.f32 %v1578, %v1816
      %v1899 = vadd.f32 %v1583, %v1821
      %v1900 = vadd.f32 %v1588, %v1826
      %v1901 = vadd.f32 %v1593, %v1831
      %v1902 = vadd.f32 %v1598, %v1836
      %v1903 = vadd.f32 %v1603, %v1841
      %v1904 = vadd.f32 %v1608, %v1846
      %v1905 = vadd.f32 %v1613, %v1851
      %v1906 = vadd.f32 %v1618, %v1856
      %v1907 = vadd.f32 %v1623, %v1861
      %v1908 = vadd.f32 %v1628, %v1866
      %v1909 = vadd.f32 %v1633, %v1871
      %v1910 = vadd.f32 %v1638, %v1876
      %v1911 = vld [vmem:[%s5 + $0x18] sm:$0xff]
      %v1912 = vld [vmem:[%s5 + $0x20] sm:$0xf]
      %v1914 = vsel %vm580, %v1912, 0
      %1916 = vmatprep.subr.mxu0 0.0
      %1917 = vmatpush1.msra.mxu0 %v1911
      %1918 = vmatprep.subr.mxu0 0.0
      %1919 = vmatpush1.msra.mxu0 %v1914
      %1920 = vmatprep.subr.mxu0 0.0
      %1921 = vmatpush1.msra.mxu0 0.0
      %1922 = vmatprep.subr.mxu0 0.0
      %1923 = vmatpush1.msra.mxu0 0.0
      %1924 = vmatprep.subr.mxu0 0.0
      %1925 = vmatpush1.msra.mxu0 0.0
      %1926 = vmatprep.subr.mxu0 0.0
      %1927 = vmatpush1.msra.mxu0 0.0
      %1928 = vmatprep.subr.mxu0 0.0
      %1929 = vmatpush1.msra.mxu0 0.0
      %1930 = vmatprep.subr.mxu0 0.0
      %1931 = vmatpush1.msra.mxu0 0.0
      %1932 = vmatprep.subr.mxu0 0.0
      %1933 = vmatpush1.msra.mxu0 0.0
      %1934 = vmatprep.subr.mxu0 0.0
      %1935 = vmatpush1.msra.mxu0 0.0
      %1936 = vmatprep.subr.mxu0 0.0
      %1937 = vmatpush1.msra.mxu0 0.0
      %1938 = vmatprep.subr.mxu0 0.0
      %1939 = vmatpush1.msra.mxu0 0.0
      %1940 = vmatprep.subr.mxu0 0.0
      %1941 = vmatpush1.msra.mxu0 0.0
      %1942 = vmatprep.subr.mxu0 0.0
      %1943 = vmatpush1.msra.mxu0 0.0
      %1944 = vmatprep.subr.mxu0 0.0
      %1945 = vmatpush1.msra.mxu0 0.0
      %1946 = vmatprep.subr.mxu0 0.0
      %1947 = vmatpush1.msra.mxu0 0.0
      %1948 = vmatprep.subr.mxu0 0.0
      %1949 = vmatpush1.msra.mxu0 0.0
      %1950 = vmatprep.subr.mxu0 0.0
      %1951 = vmatpush1.msra.mxu0 0.0
      %1952 = vmatprep.subr.mxu0 0.0
      %1953 = vmatpush1.msra.mxu0 0.0
      %1954 = vmatprep.subr.mxu0 0.0
      %1955 = vmatpush1.msra.mxu0 0.0
      %1956 = vmatprep.subr.mxu0 0.0
      %1957 = vmatpush1.msra.mxu0 0.0
      %1958 = vmatprep.subr.mxu0 0.0
      %1959 = vmatpush1.msra.mxu0 0.0
      %1960 = vmatprep.subr.mxu0 0.0
      %1961 = vmatpush1.msra.mxu0 0.0
      %1962 = vmatprep.subr.mxu0 0.0
      %1963 = vmatpush1.msra.mxu0 0.0
      %1964 = vmatprep.subr.mxu0 0.0
      %1965 = vmatpush1.msra.mxu0 0.0
      %1966 = vmatprep.subr.mxu0 0.0
      %1967 = vmatpush1.msra.mxu0 0.0
      %1968 = vmatprep.subr.mxu0 0.0
      %1969 = vmatpush1.msra.mxu0 0.0
      %1970 = vmatprep.subr.mxu0 0.0
      %1971 = vmatpush1.msra.mxu0 0.0
      %1972 = vmatprep.subr.mxu0 0.0
      %1973 = vmatpush1.msra.mxu0 0.0
      %1974 = vmatprep.subr.mxu0 0.0
      %1975 = vmatpush1.msra.mxu0 0.0
      %1976 = vmatprep.subr.mxu0 0.0
      %1977 = vmatpush1.msra.mxu0 0.0
      %1978 = vmatprep.subr.mxu0 0.0
      %1979 = vmatpush1.msra.mxu0 0.0
      %1980 = vmatprep.mubr.f32.mxu0 0.0
      %1981 = vmatmul.mubr.f32.gmra.mrb[0].mxu0 %v1328
      %v1982 = vpop.f32.mrb[0].mxu0
      %v1983 = vpop.f32.mrb[0].mxu0
      %1984 = vmatprep.mubr.f32.mxu0 0.0
      %1985 = vmatmul.mubr.f32.gmra.mrb[0].mxu0 %v1331
      %v1986 = vpop.f32.mrb[0].mxu0
      %v1987 = vpop.f32.mrb[0].mxu0
      %1988 = vmatprep.mubr.f32.mxu0 0.0
      %1989 = vmatmul.mubr.f32.gmra.mrb[0].mxu0 %v1334
      %v1990 = vpop.f32.mrb[0].mxu0
      %v1991 = vadd.f32 0.0, %v1990
      %v1992 = vpop.f32.mrb[0].mxu0
      %1993 = vmatprep.mubr.f32.mxu0 0.0
      %1994 = vmatmul.mubr.f32.gmra.mrb[0].mxu0 %v1337
      %v1995 = vpop.f32.mrb[0].mxu0
      %v1996 = vadd.f32 0.0, %v1995
      %v1997 = vpop.f32.mrb[0].mxu0
      %1998 = vmatprep.mubr.f32.mxu0 0.0
      %1999 = vmatmul.mubr.f32.gmra.mrb[0].mxu0 %v1340
      %v2000 = vpop.f32.mrb[0].mxu0
      %v2001 = vadd.f32 0.0, %v2000
      %v2002 = vpop.f32.mrb[0].mxu0
      %2003 = vmatprep.mubr.f32.mxu0 0.0
      %2004 = vmatmul.mubr.f32.gmra.mrb[0].mxu0 %v1343
      %v2005 = vpop.f32.mrb[0].mxu0
      %v2006 = vadd.f32 0.0, %v2005
      %v2007 = vpop.f32.mrb[0].mxu0
      %2008 = vmatprep.mubr.f32.mxu0 0.0
      %2009 = vmatmul.mubr.f32.gmra.mrb[0].mxu0 %v1346
      %v2010 = vpop.f32.mrb[0].mxu0
      %v2011 = vadd.f32 0.0, %v2010
      %v2012 = vpop.f32.mrb[0].mxu0
      %2013 = vmatprep.mubr.f32.mxu0 0.0
      %2014 = vmatmul.mubr.f32.gmra.mrb[0].mxu0 %v1349
      %v2015 = vpop.f32.mrb[0].mxu0
      %v2016 = vadd.f32 0.0, %v2015
      %v2017 = vpop.f32.mrb[0].mxu0
      %2018 = vmatprep.mubr.f32.mxu0 0.0
      %2019 = vmatmul.mubr.f32.gmra.mrb[0].mxu0 %v1352
      %v2020 = vpop.f32.mrb[0].mxu0
      %v2021 = vadd.f32 0.0, %v2020
      %v2022 = vpop.f32.mrb[0].mxu0
      %2023 = vmatprep.mubr.f32.mxu0 0.0
      %2024 = vmatmul.mubr.f32.gmra.mrb[0].mxu0 %v1355
      %v2025 = vpop.f32.mrb[0].mxu0
      %v2026 = vadd.f32 0.0, %v2025
      %v2027 = vpop.f32.mrb[0].mxu0
      %2028 = vmatprep.mubr.f32.mxu0 0.0
      %2029 = vmatmul.mubr.f32.gmra.mrb[0].mxu0 %v1358
      %v2030 = vpop.f32.mrb[0].mxu0
      %v2031 = vadd.f32 0.0, %v2030
      %v2032 = vpop.f32.mrb[0].mxu0
      %2033 = vmatprep.mubr.f32.mxu0 0.0
      %2034 = vmatmul.mubr.f32.gmra.mrb[0].mxu0 %v1361
      %v2035 = vpop.f32.mrb[0].mxu0
      %v2036 = vadd.f32 0.0, %v2035
      %v2037 = vpop.f32.mrb[0].mxu0
      %2038 = vmatprep.mubr.f32.mxu0 0.0
      %2039 = vmatmul.mubr.f32.gmra.mrb[0].mxu0 %v1364
      %v2040 = vpop.f32.mrb[0].mxu0
      %v2041 = vadd.f32 0.0, %v2040
      %v2042 = vpop.f32.mrb[0].mxu0
      %2043 = vmatprep.mubr.f32.mxu0 0.0
      %2044 = vmatmul.mubr.f32.gmra.mrb[0].mxu0 %v1367
      %v2045 = vpop.f32.mrb[0].mxu0
      %v2046 = vadd.f32 0.0, %v2045
      %v2047 = vpop.f32.mrb[0].mxu0
      %2048 = vmatprep.mubr.f32.mxu0 0.0
      %2049 = vmatmul.mubr.f32.gmra.mrb[0].mxu0 %v1370
      %v2050 = vpop.f32.mrb[0].mxu0
      %v2051 = vadd.f32 0.0, %v2050
      %v2052 = vpop.f32.mrb[0].mxu0
      %2053 = vmatprep.mubr.f32.mxu0 0.0
      %2054 = vmatmul.mubr.f32.gmra.mrb[0].mxu0 %v1373
      %v2055 = vpop.f32.mrb[0].mxu0
      %v2056 = vadd.f32 0.0, %v2055
      %v2057 = vpop.f32.mrb[0].mxu0
      %2058 = vmatprep.mubr.f32.mxu0 0.0
      %2059 = vmatmul.mubr.f32.gmra.mrb[0].mxu0 %v1376
      %v2060 = vpop.f32.mrb[0].mxu0
      %v2061 = vadd.f32 0.0, %v2060
      %v2062 = vpop.f32.mrb[0].mxu0
      %2063 = vmatprep.mubr.f32.mxu0 0.0
      %2064 = vmatmul.mubr.f32.gmra.mrb[0].mxu0 %v1379
      %v2065 = vpop.f32.mrb[0].mxu0
      %v2066 = vadd.f32 0.0, %v2065
      %v2067 = vpop.f32.mrb[0].mxu0
      %2068 = vmatprep.mubr.f32.mxu0 0.0
      %2069 = vmatmul.mubr.f32.gmra.mrb[0].mxu0 %v1382
      %v2070 = vpop.f32.mrb[0].mxu0
      %v2071 = vadd.f32 0.0, %v2070
      %v2072 = vpop.f32.mrb[0].mxu0
      %2073 = vmatprep.mubr.f32.mxu0 0.0
      %2074 = vmatmul.mubr.f32.gmra.mrb[0].mxu0 %v1385
      %v2075 = vpop.f32.mrb[0].mxu0
      %v2076 = vadd.f32 0.0, %v2075
      %v2077 = vpop.f32.mrb[0].mxu0
      %2078 = vmatprep.mubr.f32.mxu0 0.0
      %2079 = vmatmul.mubr.f32.gmra.mrb[0].mxu0 %v1388
      %v2080 = vpop.f32.mrb[0].mxu0
      %v2081 = vadd.f32 0.0, %v2080
      %v2082 = vpop.f32.mrb[0].mxu0
      %2083 = vmatprep.mubr.f32.mxu0 0.0
      %2084 = vmatmul.mubr.f32.gmra.mrb[0].mxu0 %v1391
      %v2085 = vpop.f32.mrb[0].mxu0
      %v2086 = vadd.f32 0.0, %v2085
      %v2087 = vpop.f32.mrb[0].mxu0
      %2088 = vmatprep.mubr.f32.mxu0 0.0
      %2089 = vmatmul.mubr.f32.gmra.mrb[0].mxu0 %v1394
      %v2090 = vpop.f32.mrb[0].mxu0
      %v2091 = vadd.f32 0.0, %v2090
      %v2092 = vpop.f32.mrb[0].mxu0
      %2093 = vmatprep.mubr.f32.mxu0 0.0
      %2094 = vmatmul.mubr.f32.gmra.mrb[0].mxu0 %v1397
      %v2095 = vpop.f32.mrb[0].mxu0
      %v2096 = vadd.f32 0.0, %v2095
      %v2097 = vpop.f32.mrb[0].mxu0
      %2098 = vmatprep.mubr.f32.mxu0 0.0
      %2099 = vmatmul.mubr.f32.gmra.mrb[0].mxu0 %v1400
      %v2100 = vpop.f32.mrb[0].mxu0
      %v2101 = vadd.f32 0.0, %v2100
      %v2102 = vpop.f32.mrb[0].mxu0
      %2103 = vmatprep.mubr.f32.mxu0 0.0
      %2104 = vmatmul.mubr.f32.gmra.mrb[0].mxu0 %v1403
      %v2105 = vpop.f32.mrb[0].mxu0
      %v2106 = vadd.f32 0.0, %v2105
      %v2107 = vpop.f32.mrb[0].mxu0
      %2108 = vmatprep.mubr.f32.mxu0 0.0
      %2109 = vmatmul.mubr.f32.gmra.mrb[0].mxu0 %v1406
      %v2110 = vpop.f32.mrb[0].mxu0
      %v2111 = vadd.f32 0.0, %v2110
      %v2112 = vpop.f32.mrb[0].mxu0
      %2113 = vmatprep.mubr.f32.mxu0 0.0
      %2114 = vmatmul.mubr.f32.gmra.mrb[0].mxu0 %v1409
      %v2115 = vpop.f32.mrb[0].mxu0
      %v2116 = vadd.f32 0.0, %v2115
      %v2117 = vpop.f32.mrb[0].mxu0
      %2118 = vmatprep.mubr.f32.mxu0 0.0
      %2119 = vmatmul.mubr.f32.gmra.mrb[0].mxu0 %v1412
      %v2120 = vpop.f32.mrb[0].mxu0
      %v2121 = vadd.f32 0.0, %v2120
      %v2122 = vpop.f32.mrb[0].mxu0
      %2123 = vmatprep.mubr.f32.mxu0 0.0
      %2124 = vmatmul.mubr.f32.gmra.mrb[0].mxu0 %v1415
      %v2125 = vpop.f32.mrb[0].mxu0
      %v2126 = vadd.f32 0.0, %v2125
      %v2127 = vpop.f32.mrb[0].mxu0
      %2128 = vmatprep.mubr.f32.mxu0 0.0
      %2129 = vmatmul.mubr.f32.gmra.mrb[0].mxu0 %v1418
      %v2130 = vpop.f32.mrb[0].mxu0
      %v2131 = vadd.f32 0.0, %v2130
      %v2132 = vpop.f32.mrb[0].mxu0
      %2133 = vmatprep.mubr.f32.mxu0 0.0
      %2134 = vmatmul.mubr.f32.gmra.mrb[0].mxu0 %v1421
      %v2135 = vpop.f32.mrb[0].mxu0
      %v2136 = vadd.f32 0.0, %v2135
      %v2137 = vpop.f32.mrb[0].mxu0
      %2138 = vdwg.mxu0
      %v2139 = vadd.f32 %v1879, %v1991
      %v2140 = vadd.f32 %v1880, %v1996
      %v2141 = vadd.f32 %v1881, %v2001
      %v2142 = vadd.f32 %v1882, %v2006
      %v2143 = vadd.f32 %v1883, %v2011
      %v2144 = vadd.f32 %v1884, %v2016
      %v2145 = vadd.f32 %v1885, %v2021
      %v2146 = vadd.f32 %v1886, %v2026
      %v2147 = vadd.f32 %v1887, %v2031
      %v2148 = vadd.f32 %v1888, %v2036
      %v2149 = vadd.f32 %v1889, %v2041
      %v2150 = vadd.f32 %v1890, %v2046
      %v2151 = vadd.f32 %v1891, %v2051
      %v2152 = vadd.f32 %v1892, %v2056
      %v2153 = vadd.f32 %v1893, %v2061
      %v2154 = vadd.f32 %v1894, %v2066
      %v2155 = vadd.f32 %v1895, %v2071
      %v2156 = vadd.f32 %v1896, %v2076
      %v2157 = vadd.f32 %v1897, %v2081
      %v2158 = vadd.f32 %v1898, %v2086
      %v2159 = vadd.f32 %v1899, %v2091
      %v2160 = vadd.f32 %v1900, %v2096
      %v2161 = vadd.f32 %v1901, %v2101
      %v2162 = vadd.f32 %v1902, %v2106
      %v2163 = vadd.f32 %v1903, %v2111
      %v2164 = vadd.f32 %v1904, %v2116
      %v2165 = vadd.f32 %v1905, %v2121
      %v2166 = vadd.f32 %v1906, %v2126
      %v2167 = vadd.f32 %v1907, %v2131
      %v2168 = vadd.f32 %v1908, %v2136
      %v2169 = vadd.f32 %v1909, 0.0
      %v2170 = vadd.f32 %v1910, 0.0
      %v2171 = vld [vmem:[%s6] sm:$0x1]
      %v2173 = vlaneseq
      %v2174 = vshrl.u32 %v2173, 7
      %v2175 = vsub.s32 0, %v2174
      %v2176 = vrot.slane %v2171, %v2175
      %v2178 = vadd.f32 %v2139, %v2176
      %v2179 = vadd.f32 %v2140, %v2176
      %v2180 = vadd.f32 %v2141, %v2176
      %v2181 = vadd.f32 %v2142, %v2176
      %v2182 = vadd.f32 %v2143, %v2176
      %v2183 = vadd.f32 %v2144, %v2176
      %v2184 = vadd.f32 %v2145, %v2176
      %v2185 = vadd.f32 %v2146, %v2176
      %v2186 = vadd.f32 %v2147, %v2176
      %v2187 = vadd.f32 %v2148, %v2176
      %v2188 = vadd.f32 %v2149, %v2176
      %v2189 = vadd.f32 %v2150, %v2176
      %v2190 = vadd.f32 %v2151, %v2176
      %v2191 = vadd.f32 %v2152, %v2176
      %v2192 = vadd.f32 %v2153, %v2176
      %v2193 = vadd.f32 %v2154, %v2176
      %v2194 = vadd.f32 %v2155, %v2176
      %v2195 = vadd.f32 %v2156, %v2176
      %v2196 = vadd.f32 %v2157, %v2176
      %v2197 = vadd.f32 %v2158, %v2176
      %v2198 = vadd.f32 %v2159, %v2176
      %v2199 = vadd.f32 %v2160, %v2176
      %v2200 = vadd.f32 %v2161, %v2176
      %v2201 = vadd.f32 %v2162, %v2176
      %v2202 = vadd.f32 %v2163, %v2176
      %v2203 = vadd.f32 %v2164, %v2176
      %v2204 = vadd.f32 %v2165, %v2176
      %v2205 = vadd.f32 %v2166, %v2176
      %v2206 = vadd.f32 %v2167, %v2176
      %v2207 = vadd.f32 %v2168, %v2176
      %v2208 = vadd.f32 %v2169, %v2176
      %v2209 = vadd.f32 %v2170, %v2176
      %v2210 = vmax.f32 %v2178, 0.0
      %v2211 = vmax.f32 %v2179, 0.0
      %v2212 = vmax.f32 %v2180, 0.0
      %v2213 = vmax.f32 %v2181, 0.0
      %v2214 = vmax.f32 %v2182, 0.0
      %v2215 = vmax.f32 %v2183, 0.0
      %v2216 = vmax.f32 %v2184, 0.0
      %v2217 = vmax.f32 %v2185, 0.0
      %v2218 = vmax.f32 %v2186, 0.0
      %v2219 = vmax.f32 %v2187, 0.0
      %v2220 = vmax.f32 %v2188, 0.0
      %v2221 = vmax.f32 %v2189, 0.0
      %v2222 = vmax.f32 %v2190, 0.0
      %v2223 = vmax.f32 %v2191, 0.0
      %v2224 = vmax.f32 %v2192, 0.0
      %v2225 = vmax.f32 %v2193, 0.0
      %v2226 = vmax.f32 %v2194, 0.0
      %v2227 = vmax.f32 %v2195, 0.0
      %v2228 = vmax.f32 %v2196, 0.0
      %v2229 = vmax.f32 %v2197, 0.0
      %v2230 = vmax.f32 %v2198, 0.0
      %v2231 = vmax.f32 %v2199, 0.0
      %v2232 = vmax.f32 %v2200, 0.0
      %v2233 = vmax.f32 %v2201, 0.0
      %v2234 = vmax.f32 %v2202, 0.0
      %v2235 = vmax.f32 %v2203, 0.0
      %v2236 = vmax.f32 %v2204, 0.0
      %v2237 = vmax.f32 %v2205, 0.0
      %v2238 = vmax.f32 %v2206, 0.0
      %v2239 = vmax.f32 %v2207, 0.0
      %v2240 = vmax.f32 %v2208, 0.0
      %v2241 = vmax.f32 %v2209, 0.0
      %2274 = vrot.lane.b32.xlu0 %v333, 4
      %v2275 = vpop.permute.xlu0 %2274
      %2276 = vrot.lane.b32.xlu0 %v334, 4
      %v2277 = vpop.permute.xlu0 %2276
      %2278 = vrot.lane.b32.xlu0 %v335, 4
      %v2279 = vpop.permute.xlu0 %2278
      %2280 = vrot.lane.b32.xlu0 %v336, 4
      %v2281 = vpop.permute.xlu0 %2280
      %2282 = vrot.lane.b32.xlu0 %v337, 4
      %v2283 = vpop.permute.xlu0 %2282
      %2284 = vrot.lane.b32.xlu0 %v338, 4
      %v2285 = vpop.permute.xlu0 %2284
      %2286 = vrot.lane.b32.xlu0 %v339, 4
      %v2287 = vpop.permute.xlu0 %2286
      %2288 = vrot.lane.b32.xlu0 %v340, 4
      %v2289 = vpop.permute.xlu0 %2288
      %2290 = vrot.lane.b32.xlu0 %v341, 4
      %v2291 = vpop.permute.xlu0 %2290
      %2292 = vrot.lane.b32.xlu0 %v342, 4
      %v2293 = vpop.permute.xlu0 %2292
      %2294 = vrot.lane.b32.xlu0 %v343, 4
      %v2295 = vpop.permute.xlu0 %2294
      %2296 = vrot.lane.b32.xlu0 %v344, 4
      %v2297 = vpop.permute.xlu0 %2296
      %2298 = vrot.lane.b32.xlu0 %v345, 4
      %v2299 = vpop.permute.xlu0 %2298
      %2300 = vrot.lane.b32.xlu0 %v346, 4
      %v2301 = vpop.permute.xlu0 %2300
      %2302 = vrot.lane.b32.xlu0 %v347, 4
      %v2303 = vpop.permute.xlu0 %2302
      %2304 = vrot.lane.b32.xlu0 %v348, 4
      %v2305 = vpop.permute.xlu0 %2304
      %2306 = vrot.lane.b32.xlu0 %v349, 4
      %v2307 = vpop.permute.xlu0 %2306
      %2308 = vrot.lane.b32.xlu0 %v350, 4
      %v2309 = vpop.permute.xlu0 %2308
      %2310 = vrot.lane.b32.xlu0 %v351, 4
      %v2311 = vpop.permute.xlu0 %2310
      %2312 = vrot.lane.b32.xlu0 %v352, 4
      %v2313 = vpop.permute.xlu0 %2312
      %2314 = vrot.lane.b32.xlu0 %v353, 4
      %v2315 = vpop.permute.xlu0 %2314
      %2316 = vrot.lane.b32.xlu0 %v354, 4
      %v2317 = vpop.permute.xlu0 %2316
      %2318 = vrot.lane.b32.xlu0 %v355, 4
      %v2319 = vpop.permute.xlu0 %2318
      %2320 = vrot.lane.b32.xlu0 %v356, 4
      %v2321 = vpop.permute.xlu0 %2320
      %2322 = vrot.lane.b32.xlu0 %v357, 4
      %v2323 = vpop.permute.xlu0 %2322
      %2324 = vrot.lane.b32.xlu0 %v358, 4
      %v2325 = vpop.permute.xlu0 %2324
      %2326 = vrot.lane.b32.xlu0 %v359, 4
      %v2327 = vpop.permute.xlu0 %2326
      %2328 = vrot.lane.b32.xlu0 %v360, 4
      %v2329 = vpop.permute.xlu0 %2328
      %2330 = vrot.lane.b32.xlu0 %v361, 4
      %v2331 = vpop.permute.xlu0 %2330
      %2332 = vrot.lane.b32.xlu0 %v362, 4
      %v2333 = vpop.permute.xlu0 %2332
      %2334 = vrot.lane.b32.xlu0 %v363, 4
      %v2335 = vpop.permute.xlu0 %2334
      %2336 = vrot.lane.b32.xlu0 %v364, 4
      %v2337 = vpop.permute.xlu0 %2336
      %v2370 = vsel %vm483, %v2210, %v2275
      %v2371 = vsel %vm483, %v2211, %v2277
      %v2372 = vsel %vm483, %v2212, %v2279
      %v2373 = vsel %vm483, %v2213, %v2281
      %v2374 = vsel %vm483, %v2214, %v2283
      %v2375 = vsel %vm483, %v2215, %v2285
      %v2376 = vsel %vm483, %v2216, %v2287
      %v2377 = vsel %vm483, %v2217, %v2289
      %v2378 = vsel %vm483, %v2218, %v2291
      %v2379 = vsel %vm483, %v2219, %v2293
      %v2380 = vsel %vm483, %v2220, %v2295
      %v2381 = vsel %vm483, %v2221, %v2297
      %v2382 = vsel %vm483, %v2222, %v2299
      %v2383 = vsel %vm483, %v2223, %v2301
      %v2384 = vsel %vm483, %v2224, %v2303
      %v2385 = vsel %vm483, %v2225, %v2305
      %v2386 = vsel %vm483, %v2226, %v2307
      %v2387 = vsel %vm483, %v2227, %v2309
      %v2388 = vsel %vm483, %v2228, %v2311
      %v2389 = vsel %vm483, %v2229, %v2313
      %v2390 = vsel %vm483, %v2230, %v2315
      %v2391 = vsel %vm483, %v2231, %v2317
      %v2392 = vsel %vm483, %v2232, %v2319
      %v2393 = vsel %vm483, %v2233, %v2321
      %v2394 = vsel %vm483, %v2234, %v2323
      %v2395 = vsel %vm483, %v2235, %v2325
      %v2396 = vsel %vm483, %v2236, %v2327
      %v2397 = vsel %vm483, %v2237, %v2329
      %v2398 = vsel %vm483, %v2238, %v2331
      %v2399 = vsel %vm483, %v2239, %v2333
      %v2400 = vsel %vm483, %v2240, %v2335
      %v2401 = vsel %vm483, %v2241, %v2337
      %v2402 = vld [vmem:[%s7] sm:$0xff]
      %v2403 = vld [vmem:[%s8] sm:$0x1]
      %v2405 = vlaneseq
      %v2406 = vshrl.u32 %v2405, 7
      %v2407 = vsub.s32 0, %v2406
      %v2408 = vrot.slane %v2403, %v2407
      %v2411 = vsel %vm1291, %v2370, 0
      %v2414 = vsel %vm1291, %v2371, 0
      %v2417 = vsel %vm1291, %v2372, 0
      %v2420 = vsel %vm1291, %v2373, 0
      %v2423 = vsel %vm1291, %v2374, 0
      %v2426 = vsel %vm1291, %v2375, 0
      %v2429 = vsel %vm1291, %v2376, 0
      %v2432 = vsel %vm1291, %v2377, 0
      %v2435 = vsel %vm1291, %v2378, 0
      %v2438 = vsel %vm1291, %v2379, 0
      %v2441 = vsel %vm1291, %v2380, 0
      %v2444 = vsel %vm1291, %v2381, 0
      %v2447 = vsel %vm1291, %v2382, 0
      %v2450 = vsel %vm1291, %v2383, 0
      %v2453 = vsel %vm1291, %v2384, 0
      %v2456 = vsel %vm1291, %v2385, 0
      %v2459 = vsel %vm1291, %v2386, 0
      %v2462 = vsel %vm1291, %v2387, 0
      %v2465 = vsel %vm1291, %v2388, 0
      %v2468 = vsel %vm1291, %v2389, 0
      %v2471 = vsel %vm1291, %v2390, 0
      %v2474 = vsel %vm1291, %v2391, 0
      %v2477 = vsel %vm1291, %v2392, 0
      %v2480 = vsel %vm1291, %v2393, 0
      %v2483 = vsel %vm1291, %v2394, 0
      %v2486 = vsel %vm1291, %v2395, 0
      %v2489 = vsel %vm1291, %v2396, 0
      %v2492 = vsel %vm1291, %v2397, 0
      %v2495 = vsel %vm1291, %v2398, 0
      %v2498 = vsel %vm1291, %v2399, 0
      %v2501 = vsel %vm1291, %v2400, 0
      %v2504 = vsel %vm1291, %v2401, 0
      %2506 = vmatprep.subr.mxu0 0.0
      %2507 = vmatpush1.msra.mxu0 %v2402
      %2508 = vmatprep.subr.mxu0 0.0
      %2509 = vmatpush1.msra.mxu0 0.0
      %2510 = vmatprep.subr.mxu0 0.0
      %2511 = vmatpush1.msra.mxu0 0.0
      %2512 = vmatprep.subr.mxu0 0.0
      %2513 = vmatpush1.msra.mxu0 0.0
      %2514 = vmatprep.subr.mxu0 0.0
      %2515 = vmatpush1.msra.mxu0 0.0
      %2516 = vmatprep.subr.mxu0 0.0
      %2517 = vmatpush1.msra.mxu0 0.0
      %2518 = vmatprep.subr.mxu0 0.0
      %2519 = vmatpush1.msra.mxu0 0.0
      %2520 = vmatprep.subr.mxu0 0.0
      %2521 = vmatpush1.msra.mxu0 0.0
      %2522 = vmatprep.subr.mxu0 0.0
      %2523 = vmatpush1.msra.mxu0 0.0
      %2524 = vmatprep.subr.mxu0 0.0
      %2525 = vmatpush1.msra.mxu0 0.0
      %2526 = vmatprep.subr.mxu0 0.0
      %2527 = vmatpush1.msra.mxu0 0.0
      %2528 = vmatprep.subr.mxu0 0.0
      %2529 = vmatpush1.msra.mxu0 0.0
      %2530 = vmatprep.subr.mxu0 0.0
      %2531 = vmatpush1.msra.mxu0 0.0
      %2532 = vmatprep.subr.mxu0 0.0
      %2533 = vmatpush1.msra.mxu0 0.0
      %2534 = vmatprep.subr.mxu0 0.0
      %2535 = vmatpush1.msra.mxu0 0.0
      %2536 = vmatprep.subr.mxu0 0.0
      %2537 = vmatpush1.msra.mxu0 0.0
      %2538 = vmatprep.subr.mxu0 0.0
      %2539 = vmatpush1.msra.mxu0 0.0
      %2540 = vmatprep.subr.mxu0 0.0
      %2541 = vmatpush1.msra.mxu0 0.0
      %2542 = vmatprep.subr.mxu0 0.0
      %2543 = vmatpush1.msra.mxu0 0.0
      %2544 = vmatprep.subr.mxu0 0.0
      %2545 = vmatpush1.msra.mxu0 0.0
      %2546 = vmatprep.subr.mxu0 0.0
      %2547 = vmatpush1.msra.mxu0 0.0
      %2548 = vmatprep.subr.mxu0 0.0
      %2549 = vmatpush1.msra.mxu0 0.0
      %2550 = vmatprep.subr.mxu0 0.0
      %2551 = vmatpush1.msra.mxu0 0.0
      %2552 = vmatprep.subr.mxu0 0.0
      %2553 = vmatpush1.msra.mxu0 0.0
      %2554 = vmatprep.subr.mxu0 0.0
      %2555 = vmatpush1.msra.mxu0 0.0
      %2556 = vmatprep.subr.mxu0 0.0
      %2557 = vmatpush1.msra.mxu0 0.0
      %2558 = vmatprep.subr.mxu0 0.0
      %2559 = vmatpush1.msra.mxu0 0.0
      %2560 = vmatprep.subr.mxu0 0.0
      %2561 = vmatpush1.msra.mxu0 0.0
      %2562 = vmatprep.subr.mxu0 0.0
      %2563 = vmatpush1.msra.mxu0 0.0
      %2564 = vmatprep.subr.mxu0 0.0
      %2565 = vmatpush1.msra.mxu0 0.0
      %2566 = vmatprep.subr.mxu0 0.0
      %2567 = vmatpush1.msra.mxu0 0.0
      %2568 = vmatprep.subr.mxu0 0.0
      %2569 = vmatpush1.msra.mxu0 0.0
      %2570 = vmatprep.mubr.f32.mxu0 0.0
      %2571 = vmatmul.mubr.f32.gmra.mrb[0].mxu0 %v2411
      %v2572 = vpop.f32.mrb[0].mxu0
      %v2573 = vadd.f32 %v2408, %v2572
      %v2574 = vpop.f32.mrb[0].mxu0
      %2575 = vmatprep.mubr.f32.mxu0 0.0
      %2576 = vmatmul.mubr.f32.gmra.mrb[0].mxu0 %v2414
      %v2577 = vpop.f32.mrb[0].mxu0
      %v2578 = vadd.f32 %v2408, %v2577
      %v2579 = vpop.f32.mrb[0].mxu0
      %2580 = vmatprep.mubr.f32.mxu0 0.0
      %2581 = vmatmul.mubr.f32.gmra.mrb[0].mxu0 %v2417
      %v2582 = vpop.f32.mrb[0].mxu0
      %v2583 = vadd.f32 %v2408, %v2582
      %v2584 = vpop.f32.mrb[0].mxu0
      %2585 = vmatprep.mubr.f32.mxu0 0.0
      %2586 = vmatmul.mubr.f32.gmra.mrb[0].mxu0 %v2420
      %v2587 = vpop.f32.mrb[0].mxu0
      %v2588 = vadd.f32 %v2408, %v2587
      %v2589 = vpop.f32.mrb[0].mxu0
      %2590 = vmatprep.mubr.f32.mxu0 0.0
      %2591 = vmatmul.mubr.f32.gmra.mrb[0].mxu0 %v2423
      %v2592 = vpop.f32.mrb[0].mxu0
      %v2593 = vadd.f32 %v2408, %v2592
      %v2594 = vpop.f32.mrb[0].mxu0
      %2595 = vmatprep.mubr.f32.mxu0 0.0
      %2596 = vmatmul.mubr.f32.gmra.mrb[0].mxu0 %v2426
      %v2597 = vpop.f32.mrb[0].mxu0
      %v2598 = vadd.f32 %v2408, %v2597
      %v2599 = vpop.f32.mrb[0].mxu0
      %2600 = vmatprep.mubr.f32.mxu0 0.0
      %2601 = vmatmul.mubr.f32.gmra.mrb[0].mxu0 %v2429
      %v2602 = vpop.f32.mrb[0].mxu0
      %v2603 = vadd.f32 %v2408, %v2602
      %v2604 = vpop.f32.mrb[0].mxu0
      %2605 = vmatprep.mubr.f32.mxu0 0.0
      %2606 = vmatmul.mubr.f32.gmra.mrb[0].mxu0 %v2432
      %v2607 = vpop.f32.mrb[0].mxu0
      %v2608 = vadd.f32 %v2408, %v2607
      %v2609 = vpop.f32.mrb[0].mxu0
      %2610 = vmatprep.mubr.f32.mxu0 0.0
      %2611 = vmatmul.mubr.f32.gmra.mrb[0].mxu0 %v2435
      %v2612 = vpop.f32.mrb[0].mxu0
      %v2613 = vadd.f32 %v2408, %v2612
      %v2614 = vpop.f32.mrb[0].mxu0
      %2615 = vmatprep.mubr.f32.mxu0 0.0
      %2616 = vmatmul.mubr.f32.gmra.mrb[0].mxu0 %v2438
      %v2617 = vpop.f32.mrb[0].mxu0
      %v2618 = vadd.f32 %v2408, %v2617
      %v2619 = vpop.f32.mrb[0].mxu0
      %2620 = vmatprep.mubr.f32.mxu0 0.0
      %2621 = vmatmul.mubr.f32.gmra.mrb[0].mxu0 %v2441
      %v2622 = vpop.f32.mrb[0].mxu0
      %v2623 = vadd.f32 %v2408, %v2622
      %v2624 = vpop.f32.mrb[0].mxu0
      %2625 = vmatprep.mubr.f32.mxu0 0.0
      %2626 = vmatmul.mubr.f32.gmra.mrb[0].mxu0 %v2444
      %v2627 = vpop.f32.mrb[0].mxu0
      %v2628 = vadd.f32 %v2408, %v2627
      %v2629 = vpop.f32.mrb[0].mxu0
      %2630 = vmatprep.mubr.f32.mxu0 0.0
      %2631 = vmatmul.mubr.f32.gmra.mrb[0].mxu0 %v2447
      %v2632 = vpop.f32.mrb[0].mxu0
      %v2633 = vadd.f32 %v2408, %v2632
      %v2634 = vpop.f32.mrb[0].mxu0
      %2635 = vmatprep.mubr.f32.mxu0 0.0
      %2636 = vmatmul.mubr.f32.gmra.mrb[0].mxu0 %v2450
      %v2637 = vpop.f32.mrb[0].mxu0
      %v2638 = vadd.f32 %v2408, %v2637
      %v2639 = vpop.f32.mrb[0].mxu0
      %2640 = vmatprep.mubr.f32.mxu0 0.0
      %2641 = vmatmul.mubr.f32.gmra.mrb[0].mxu0 %v2453
      %v2642 = vpop.f32.mrb[0].mxu0
      %v2643 = vadd.f32 %v2408, %v2642
      %v2644 = vpop.f32.mrb[0].mxu0
      %2645 = vmatprep.mubr.f32.mxu0 0.0
      %2646 = vmatmul.mubr.f32.gmra.mrb[0].mxu0 %v2456
      %v2647 = vpop.f32.mrb[0].mxu0
      %v2648 = vadd.f32 %v2408, %v2647
      %v2649 = vpop.f32.mrb[0].mxu0
      %2650 = vmatprep.mubr.f32.mxu0 0.0
      %2651 = vmatmul.mubr.f32.gmra.mrb[0].mxu0 %v2459
      %v2652 = vpop.f32.mrb[0].mxu0
      %v2653 = vadd.f32 %v2408, %v2652
      %v2654 = vpop.f32.mrb[0].mxu0
      %2655 = vmatprep.mubr.f32.mxu0 0.0
      %2656 = vmatmul.mubr.f32.gmra.mrb[0].mxu0 %v2462
      %v2657 = vpop.f32.mrb[0].mxu0
      %v2658 = vadd.f32 %v2408, %v2657
      %v2659 = vpop.f32.mrb[0].mxu0
      %2660 = vmatprep.mubr.f32.mxu0 0.0
      %2661 = vmatmul.mubr.f32.gmra.mrb[0].mxu0 %v2465
      %v2662 = vpop.f32.mrb[0].mxu0
      %v2663 = vadd.f32 %v2408, %v2662
      %v2664 = vpop.f32.mrb[0].mxu0
      %2665 = vmatprep.mubr.f32.mxu0 0.0
      %2666 = vmatmul.mubr.f32.gmra.mrb[0].mxu0 %v2468
      %v2667 = vpop.f32.mrb[0].mxu0
      %v2668 = vadd.f32 %v2408, %v2667
      %v2669 = vpop.f32.mrb[0].mxu0
      %2670 = vmatprep.mubr.f32.mxu0 0.0
      %2671 = vmatmul.mubr.f32.gmra.mrb[0].mxu0 %v2471
      %v2672 = vpop.f32.mrb[0].mxu0
      %v2673 = vadd.f32 %v2408, %v2672
      %v2674 = vpop.f32.mrb[0].mxu0
      %2675 = vmatprep.mubr.f32.mxu0 0.0
      %2676 = vmatmul.mubr.f32.gmra.mrb[0].mxu0 %v2474
      %v2677 = vpop.f32.mrb[0].mxu0
      %v2678 = vadd.f32 %v2408, %v2677
      %v2679 = vpop.f32.mrb[0].mxu0
      %2680 = vmatprep.mubr.f32.mxu0 0.0
      %2681 = vmatmul.mubr.f32.gmra.mrb[0].mxu0 %v2477
      %v2682 = vpop.f32.mrb[0].mxu0
      %v2683 = vadd.f32 %v2408, %v2682
      %v2684 = vpop.f32.mrb[0].mxu0
      %2685 = vmatprep.mubr.f32.mxu0 0.0
      %2686 = vmatmul.mubr.f32.gmra.mrb[0].mxu0 %v2480
      %v2687 = vpop.f32.mrb[0].mxu0
      %v2688 = vadd.f32 %v2408, %v2687
      %v2689 = vpop.f32.mrb[0].mxu0
      %2690 = vmatprep.mubr.f32.mxu0 0.0
      %2691 = vmatmul.mubr.f32.gmra.mrb[0].mxu0 %v2483
      %v2692 = vpop.f32.mrb[0].mxu0
      %v2693 = vadd.f32 %v2408, %v2692
      %v2694 = vpop.f32.mrb[0].mxu0
      %2695 = vmatprep.mubr.f32.mxu0 0.0
      %2696 = vmatmul.mubr.f32.gmra.mrb[0].mxu0 %v2486
      %v2697 = vpop.f32.mrb[0].mxu0
      %v2698 = vadd.f32 %v2408, %v2697
      %v2699 = vpop.f32.mrb[0].mxu0
      %2700 = vmatprep.mubr.f32.mxu0 0.0
      %2701 = vmatmul.mubr.f32.gmra.mrb[0].mxu0 %v2489
      %v2702 = vpop.f32.mrb[0].mxu0
      %v2703 = vadd.f32 %v2408, %v2702
      %v2704 = vpop.f32.mrb[0].mxu0
      %2705 = vmatprep.mubr.f32.mxu0 0.0
      %2706 = vmatmul.mubr.f32.gmra.mrb[0].mxu0 %v2492
      %v2707 = vpop.f32.mrb[0].mxu0
      %v2708 = vadd.f32 %v2408, %v2707
      %v2709 = vpop.f32.mrb[0].mxu0
      %2710 = vmatprep.mubr.f32.mxu0 0.0
      %2711 = vmatmul.mubr.f32.gmra.mrb[0].mxu0 %v2495
      %v2712 = vpop.f32.mrb[0].mxu0
      %v2713 = vadd.f32 %v2408, %v2712
      %v2714 = vpop.f32.mrb[0].mxu0
      %2715 = vmatprep.mubr.f32.mxu0 0.0
      %2716 = vmatmul.mubr.f32.gmra.mrb[0].mxu0 %v2498
      %v2717 = vpop.f32.mrb[0].mxu0
      %v2718 = vadd.f32 %v2408, %v2717
      %v2719 = vpop.f32.mrb[0].mxu0
      %2720 = vmatprep.mubr.f32.mxu0 0.0
      %2721 = vmatmul.mubr.f32.gmra.mrb[0].mxu0 %v2501
      %v2722 = vpop.f32.mrb[0].mxu0
      %v2723 = vadd.f32 %v2408, %v2722
      %v2724 = vpop.f32.mrb[0].mxu0
      %2725 = vmatprep.mubr.f32.mxu0 0.0
      %2726 = vmatmul.mubr.f32.gmra.mrb[0].mxu0 %v2504
      %v2727 = vpop.f32.mrb[0].mxu0
      %v2728 = vadd.f32 %v2408, %v2727
      %v2729 = vpop.f32.mrb[0].mxu0
      %2730 = vdwg.mxu0
      %v2731 = vmax.f32 %v2573, 0.0
      %v2732 = vmax.f32 %v2578, 0.0
      %v2733 = vmax.f32 %v2583, 0.0
      %v2734 = vmax.f32 %v2588, 0.0
      %v2735 = vmax.f32 %v2593, 0.0
      %v2736 = vmax.f32 %v2598, 0.0
      %v2737 = vmax.f32 %v2603, 0.0
      %v2738 = vmax.f32 %v2608, 0.0
      %v2739 = vmax.f32 %v2613, 0.0
      %v2740 = vmax.f32 %v2618, 0.0
      %v2741 = vmax.f32 %v2623, 0.0
      %v2742 = vmax.f32 %v2628, 0.0
      %v2743 = vmax.f32 %v2633, 0.0
      %v2744 = vmax.f32 %v2638, 0.0
      %v2745 = vmax.f32 %v2643, 0.0
      %v2746 = vmax.f32 %v2648, 0.0
      %v2747 = vmax.f32 %v2653, 0.0
      %v2748 = vmax.f32 %v2658, 0.0
      %v2749 = vmax.f32 %v2663, 0.0
      %v2750 = vmax.f32 %v2668, 0.0
      %v2751 = vmax.f32 %v2673, 0.0
      %v2752 = vmax.f32 %v2678, 0.0
      %v2753 = vmax.f32 %v2683, 0.0
      %v2754 = vmax.f32 %v2688, 0.0
      %v2755 = vmax.f32 %v2693, 0.0
      %v2756 = vmax.f32 %v2698, 0.0
      %v2757 = vmax.f32 %v2703, 0.0
      %v2758 = vmax.f32 %v2708, 0.0
      %v2759 = vmax.f32 %v2713, 0.0
      %v2760 = vmax.f32 %v2718, 0.0
      %v2761 = vmax.f32 %v2723, 0.0
      %v2762 = vmax.f32 %v2728, 0.0
      %2763 = vst.msk [vmem:[%s332] sm:$0xff] %vm1291, %v2731
      %2764 = vst.msk [vmem:[%s332 + $0x8] sm:$0xff] %vm1291, %v2732
      %2765 = vst.msk [vmem:[%s332 + $0x10] sm:$0xff] %vm1291, %v2733
      %2766 = vst.msk [vmem:[%s332 + $0x18] sm:$0xff] %vm1291, %v2734
      %2767 = vst.msk [vmem:[%s332 + $0x20] sm:$0xff] %vm1291, %v2735
      %2768 = vst.msk [vmem:[%s332 + $0x28] sm:$0xff] %vm1291, %v2736
      %2769 = vst.msk [vmem:[%s332 + $0x30] sm:$0xff] %vm1291, %v2737
      %2770 = vst.msk [vmem:[%s332 + $0x38] sm:$0xff] %vm1291, %v2738
      %2771 = vst.msk [vmem:[%s332 + $0x40] sm:$0xff] %vm1291, %v2739
      %2772 = vst.msk [vmem:[%s332 + $0x48] sm:$0xff] %vm1291, %v2740
      %2773 = vst.msk [vmem:[%s332 + $0x50] sm:$0xff] %vm1291, %v2741
      %2774 = vst.msk [vmem:[%s332 + $0x58] sm:$0xff] %vm1291, %v2742
      %2775 = vst.msk [vmem:[%s332 + $0x60] sm:$0xff] %vm1291, %v2743
      %2776 = vst.msk [vmem:[%s332 + $0x68] sm:$0xff] %vm1291, %v2744
      %2777 = vst.msk [vmem:[%s332 + $0x70] sm:$0xff] %vm1291, %v2745
      %2778 = vst.msk [vmem:[%s332 + $0x78] sm:$0xff] %vm1291, %v2746
      %2779 = vst.msk [vmem:[%s332 + $0x80] sm:$0xff] %vm1291, %v2747
      %2780 = vst.msk [vmem:[%s332 + $0x88] sm:$0xff] %vm1291, %v2748
      %2781 = vst.msk [vmem:[%s332 + $0x90] sm:$0xff] %vm1291, %v2749
      %2782 = vst.msk [vmem:[%s332 + $0x98] sm:$0xff] %vm1291, %v2750
      %2783 = vst.msk [vmem:[%s332 + $0xa0] sm:$0xff] %vm1291, %v2751
      %2784 = vst.msk [vmem:[%s332 + $0xa8] sm:$0xff] %vm1291, %v2752
      %2785 = vst.msk [vmem:[%s332 + $0xb0] sm:$0xff] %vm1291, %v2753
      %2786 = vst.msk [vmem:[%s332 + $0xb8] sm:$0xff] %vm1291, %v2754
      %2787 = vst.msk [vmem:[%s332 + $0xc0] sm:$0xff] %vm1291, %v2755
      %2788 = vst.msk [vmem:[%s332 + $0xc8] sm:$0xff] %vm1291, %v2756
      %2789 = vst.msk [vmem:[%s332 + $0xd0] sm:$0xff] %vm1291, %v2757
      %2790 = vst.msk [vmem:[%s332 + $0xd8] sm:$0xff] %vm1291, %v2758
      %2791 = vst.msk [vmem:[%s332 + $0xe0] sm:$0xff] %vm1291, %v2759
      %2792 = vst.msk [vmem:[%s332 + $0xe8] sm:$0xff] %vm1291, %v2760
      %2793 = vst.msk [vmem:[%s332 + $0xf0] sm:$0xff] %vm1291, %v2761
      %2794 = vst.msk [vmem:[%s332 + $0xf8] sm:$0xff] %vm1291, %v2762
      %p2795 = scmp.lt.s32.totalorder %s20, 1
      %s2796 = scalar_select %p2795, %s20, 1
      %s2797 = smul.addr %s2796, 32
      %s2798 = smul.addr %s2797, 8
      %s2799 = scalar_lea.vmem %s9, %s2798
      // Predicated region
      $region57: #{tpu_custom_call.1} parent=55 // pred_check
        %p2800 = pneg %p232
      $region58: #{tpu_custom_call.1} parent=55 // pred_check_branch
        %2802 = sbr.rel (%p2800) target = $region60
      $region59: #{tpu_custom_call.1} parent=55 // pred_region
        _
      $region60: #{tpu_custom_call.1} parent=55 // pred_fallthru
        _
    $region56: #{tpu_custom_call.1} parent=5 // pred_fallthru
      _
    %p2803 = scmp.le.s32.totalorder 2, %s15
    // Predicated region
    $region61: #{tpu_custom_call.1} parent=5 // pred_check
      %p2804 = pneg %p2803
    $region62: #{tpu_custom_call.1} parent=5 // pred_check_branch
      %2806 = sbr.rel (%p2804) target = $region64
    $region63: #{tpu_custom_call.1} parent=5 // pred_region
      %s2807 = ssub.s32 %s15, 2
      // Predicated region
      $region65: #{tpu_custom_call.1} parent=63 // pred_check
        %p2808 = pneg %p238
      $region66: #{tpu_custom_call.1} parent=63 // pred_check_branch
        %2810 = sbr.rel (%p2808) target = $region68
      $region67: #{tpu_custom_call.1} parent=63 // pred_region
        %p2811 = scmp.lt.s32.totalorder %s21, 1
        %s2812 = scalar_select %p2811, %s21, 1
        %s2813 = smul.addr %s2812, 32
        %s2814 = smul.addr %s2813, 8
        %s2815 = scalar_lea.vmem %s9, %s2814
      $region68: #{tpu_custom_call.1} parent=63 // pred_fallthru
        _
    $region64: #{tpu_custom_call.1} parent=5 // pred_fallthru
      _
  $region6: #{tpu_custom_call.1} parent=0 // loop_footer
    %s19 = sadd.s32 1, %s15
  $region7: #{tpu_custom_call.1} parent=0 // loop_footer_branch
    %14 = sbr.rel target = $region3
  $region8: #{tpu_custom_call.1} parent=0 // loop_exit
    _

</llo_original>
